<compile_context>
chip_gen: v5e
topology: v5e:2x2
jax: 0.10.0
libtpu: 0.0.40
codegen_flags: <defaults>
</compile_context>

<pallas_src>
import functools

import jax
import jax.numpy as jnp
from jax.experimental import pallas as pl
from jax.experimental.pallas import tpu as pltpu

EPS = 1e-5


# ---------------------------------------------------------------------------
# Fused kernel.  Grid = (phase, image-block):
#   phase 0: accumulate sum(x), sum(x^2)                      -> BN1 stats
#   phase 1: conv2 pre-BN output z (cached), sum(z), sum(z^2) -> BN2 stats
#   phase 2: BN2 + ReLU + per-image GAP + Linear(F, 1) from the z cache
def fused_kernel(x_ref, px_ref, sel_ref, mask_ref, gap_ref, p1_ref, w2_ref,
                 p2_ref, b3_ref, o_ref,
                 sx_ref, sxx_ref, s2_ref, ss2_ref, z_ref,
                 *, n_img, hw, hw2, bn, feat):
    p = pl.program_id(0)
    n = pl.program_id(1)

    @pl.when(jnp.logical_and(p == 0, n == 0))
    def _init():
        sx_ref[...] = jnp.zeros_like(sx_ref)
        sxx_ref[...] = jnp.zeros_like(sxx_ref)
        s2_ref[...] = jnp.zeros_like(s2_ref)
        ss2_ref[...] = jnp.zeros_like(ss2_ref)

    # ---- phase 0: BN1 batch statistics of the single-channel input --------
    @pl.when(p == 0)
    def _phase0():
        x = x_ref[...]                                        # (bn, hw)
        sx_ref[...] += jnp.sum(x, keepdims=True)              # (1, 1)
        sxx_ref[...] += jnp.sum(x * x, keepdims=True)         # (1, 1)

    # ---- phase 1: conv2 pre-BN output (cached) + BN2 batch stats ----------
    @pl.when(p == 1)
    def _phase1():
        # Conv1(1x1)+BN1+ReLU fold to a per-channel affine relu(a*x + c);
        # params arrive pre-expanded to the 27-wide (channel, tap) layout.
        inv_cnt = 1.0 / float(n_img * hw)
        mx = sx_ref[...] * inv_cnt                            # (1, 1)
        vx = sxx_ref[...] * inv_cnt - mx * mx                 # (1, 1)
        w1 = p1_ref[0:1, :]                                   # (1, 27)
        g1 = p1_ref[1:2, :]
        be1 = p1_ref[2:3, :]
        a = w1 * g1 * jax.lax.rsqrt(w1 * w1 * vx + EPS)       # (1, 27)
        c = be1 - a * mx                                      # (1, 27)

        # Replicate the 9 taps into 27 lanes with a static selector matmul
        # (BN1 scale folded into the selector columns), then one dense dot.
        px = px_ref[...]                                      # (bn*hw2, 9)
        sel_a = sel_ref[...] * a                              # (9, 27)
        y = jnp.maximum(
            jnp.dot(px, sel_a, preferred_element_type=jnp.float32) + c, 0.0)
        y = y * mask_ref[...]                                 # zero padding
        z = jnp.dot(y, w2_ref[...],
                    preferred_element_type=jnp.float32) + p2_ref[0:1, :]
        z_ref[n] = z                                          # cache for p=2
        s2_ref[...] += jnp.sum(z, axis=0, keepdims=True)      # (1, F)
        ss2_ref[...] += jnp.sum(z * z, axis=0, keepdims=True)

    # ---- phase 2: BN2 + ReLU + per-image GAP + Linear(F, 1) ---------------
    @pl.when(p == 2)
    def _phase2():
        z = z_ref[n]                                          # (bn*hw2, F)
        inv_cnt2 = 1.0 / float(n_img * hw2)
        m2 = s2_ref[...] * inv_cnt2                           # (1, F)
        v2 = ss2_ref[...] * inv_cnt2 - m2 * m2
        g2 = p2_ref[1:2, :]
        be2 = p2_ref[2:3, :]
        zn = jnp.maximum((z - m2) * (g2 * jax.lax.rsqrt(v2 + EPS)) + be2, 0.0)
        # GAP as a tiny averaging matmul: (bn, bn*hw2) @ (bn*hw2, F).
        emb = jnp.dot(gap_ref[...], zn,
                      preferred_element_type=jnp.float32)     # (bn, F)
        w3 = p2_ref[3:4, :]                                   # (1, F)
        o_ref[...] = (jnp.sum(emb * w3, axis=1, keepdims=True)
                      + b3_ref[...])                          # (bn, 1)


def binarized_forward(x_nchw, params):
    N, cin, H, W = x_nchw.shape
    assert cin == 1
    feat = params["conv2_w"].shape[0]
    H2 = (H + 2 - 3) // 2 + 1
    W2 = (W + 2 - 3) // 2 + 1
    hw, hw2 = H * W, H2 * W2

    # Images per grid step.
    if N <= 8:
        bn = N
    elif N % 8 == 0:
        bn = 8
    else:
        # TODO(synk): pad + mask the batch when N > 8 and N % 8 != 0.
        raise ValueError("batch size must be <= 8 or a multiple of 8")
    n_blk = N // bn
    m_blk = bn * hw2

    x = x_nchw.reshape(N, H, W).astype(jnp.float32)
    x2d = x.reshape(N, hw)                                    # (N, H*W)

    # Index glue only: 3x3 / stride-2 / pad-1 taps of the RAW 1-channel input
    # plus a static validity mask (the real network zero-pads the post-BN
    # activation, so padded taps must be zeroed after the fused affine+ReLU).
    xp = jnp.pad(x, ((0, 0), (1, 1), (1, 1)))
    mp = jnp.pad(jnp.ones((H, W), jnp.float32), ((1, 1), (1, 1)))
    taps, mtaps = [], []
    for ky in range(3):
        for kx in range(3):
            taps.append(xp[:, ky:ky + 2 * H2 - 1:2, kx:kx + 2 * W2 - 1:2])
            mtaps.append(mp[ky:ky + 2 * H2 - 1:2, kx:kx + 2 * W2 - 1:2])
    px = jnp.stack(taps, axis=-1).reshape(N * hw2, 9)         # (N*hw2, 9)
    mask9 = jnp.stack(mtaps, axis=-1).reshape(hw2, 9)
    mask27 = jnp.tile(jnp.tile(mask9, (1, 3)), (bn, 1))       # (bn*hw2, 27)

    # Static 0/1 selector replicating the 9 taps to the 27-wide
    # (channel-major, tap-minor) layout via one small MXU dot.
    sel = jnp.tile(jnp.eye(9, dtype=jnp.float32), (1, 3))     # (9, 27)

    # Static per-image-block averaging matrix for the global average pool.
    row_img = jnp.arange(m_blk) // hw2
    gap = (row_img[None, :] == jnp.arange(bn)[:, None]).astype(jnp.float32)
    gap = gap / float(hw2)                                    # (bn, bn*hw2)

    # Small parameters packed into a few blocks (fetched once).
    w1 = params["conv1_w"].reshape(3)
    p1 = jnp.stack([jnp.repeat(w1, 9), jnp.repeat(params["bn1_g"], 9),
                    jnp.repeat(params["bn1_b"], 9)], axis=0)  # (3, 27)
    # (F, 3, 3, 3) -> (3, 3, 3, F) -> (27, F): channel-major, taps row-major.
    w2 = jnp.transpose(params["conv2_w"], (1, 2, 3, 0)).reshape(27, feat)
    p2 = jnp.stack([params["conv2_b"], params["bn2_g"], params["bn2_b"],
                    params["fc_w"].reshape(feat)], axis=0)    # (4, F)
    b3 = params["fc_b"].reshape(1, 1)

    # VMEM budget: z cache + (double-buffered) input blocks + headroom.
    z_cache_bytes = n_blk * m_blk * feat * 4
    vmem_est = (z_cache_bytes + 3 * bn * hw * 4 + 3 * m_blk * 9 * 4
                + 2 * m_blk * 27 * 4 + bn * m_blk * 4 + (8 << 20))
    # TODO(synk): chunk the batch (multi-call stats) if the z cache outgrows
    # v7x's 64 MiB VMEM.
    assert vmem_est < (48 << 20), "batch too large for single-call z cache"
    vmem_limit = int(max(vmem_est, 32 << 20))

    kernel = functools.partial(fused_kernel, n_img=N, hw=hw, hw2=hw2,
                               bn=bn, feat=feat)
    out = pl.pallas_call(
        kernel,
        grid=(3, n_blk),
        in_specs=[
            # x: only read in phase 0 (pinned to block 0 otherwise).
            pl.BlockSpec((bn, hw), lambda p, n: (jnp.where(p == 0, n, 0), 0)),
            # patches: only read in phase 1 (phase 2 uses the z cache).
            pl.BlockSpec((m_blk, 9),
                         lambda p, n: (jnp.where(p == 1, n, 0), 0)),
            pl.BlockSpec((9, 27), lambda p, n: (0, 0)),        # tap selector
            pl.BlockSpec((m_blk, 27), lambda p, n: (0, 0)),    # pad mask
            pl.BlockSpec((bn, m_blk), lambda p, n: (0, 0)),    # GAP matrix
            pl.BlockSpec((3, 27), lambda p, n: (0, 0)),        # conv1/bn1
            pl.BlockSpec((27, feat), lambda p, n: (0, 0)),     # conv2 weight
            pl.BlockSpec((4, feat), lambda p, n: (0, 0)),      # b2/g2/be2/w3
            pl.BlockSpec((1, 1), lambda p, n: (0, 0)),         # fc bias
        ],
        # Per-image-block output, written only in phase 2.
        out_specs=pl.BlockSpec((bn, 1),
                               lambda p, n: (jnp.where(p == 2, n, 0), 0)),
        out_shape=jax.ShapeDtypeStruct((N, 1), jnp.float32),
        scratch_shapes=[
            pltpu.VMEM((1, 1), jnp.float32),                  # sum(x)
            pltpu.VMEM((1, 1), jnp.float32),                  # sum(x^2)
            pltpu.VMEM((1, feat), jnp.float32),               # sum(conv2)
            pltpu.VMEM((1, feat), jnp.float32),               # sum(conv2^2)
            pltpu.VMEM((n_blk, m_blk, feat), jnp.float32),    # z cache
        ],
        compiler_params=pltpu.CompilerParams(
            dimension_semantics=("arbitrary", "arbitrary"),
            vmem_limit_bytes=vmem_limit),
    )(x2d, px, sel, mask27, gap, p1, w2, p2, b3)
    return out


# ---------------------------------------------------------------------------
# Pure-JAX reference (same math, XLA ops) for a correctness cross-check.
def reference_forward(x_nchw, params):
    x = jnp.transpose(x_nchw, (0, 2, 3, 1))                   # (N,H,W,1)
    y = x * params["conv1_w"].reshape(1, 1, 1, 3) + params["conv1_b"]
    m = jnp.mean(y, axis=(0, 1, 2), keepdims=True)
    v = jnp.mean(jnp.square(y - m), axis=(0, 1, 2), keepdims=True)
    y = (y - m) * jax.lax.rsqrt(v + EPS) * params["bn1_g"] + params["bn1_b"]
    y = jnp.maximum(y, 0.0)

    rhs = jnp.transpose(params["conv2_w"], (2, 3, 1, 0))      # HWIO
    y = jax.lax.conv_general_dilated(
        y, rhs, window_strides=(2, 2), padding=((1, 1), (1, 1)),
        dimension_numbers=("NHWC", "HWIO", "NHWC")) + params["conv2_b"]
    m = jnp.mean(y, axis=(0, 1, 2), keepdims=True)
    v = jnp.mean(jnp.square(y - m), axis=(0, 1, 2), keepdims=True)
    y = (y - m) * jax.lax.rsqrt(v + EPS) * params["bn2_g"] + params["bn2_b"]
    y = jnp.maximum(y, 0.0)
    emb = jnp.mean(y, axis=(1, 2))                            # (N, F)
    return emb @ params["fc_w"].T + params["fc_b"]


def init_params(key, feat=32):
    ks = jax.random.split(key, 8)
    f32 = jnp.float32
    return {
        "conv1_w": 0.5 * jax.random.normal(ks[0], (3, 1, 1, 1), f32),
        "conv1_b": 0.1 * jax.random.normal(ks[1], (3,), f32),
        "bn1_g": 1.0 + 0.1 * jax.random.normal(ks[2], (3,), f32),
        "bn1_b": 0.1 * jax.random.normal(ks[3], (3,), f32),
        "conv2_w": 0.2 * jax.random.normal(ks[4], (feat, 3, 3, 3), f32),
        "conv2_b": 0.1 * jax.random.normal(ks[5], (feat,), f32),
        "bn2_g": 1.0 + 0.1 * jax.random.normal(ks[6], (feat,), f32),
        "bn2_b": jnp.zeros((feat,), f32),
        "fc_w": 0.1 * jax.random.normal(ks[7], (1, feat), f32),
        "fc_b": jnp.zeros((1,), f32),
    }


if __name__ == "__main__":
    key = jax.random.PRNGKey(0)
    kx, kp = jax.random.split(key)
    x = jax.random.normal(kx, (2, 1, 16, 16), jnp.float32)    # NCHW
    params = init_params(kp, feat=32)

    out = jax.block_until_ready(binarized_forward(x, params))
    ref = jax.block_until_ready(reference_forward(x, params))

    assert out.shape == (2, 1), out.shape
    assert jnp.allclose(out, ref, rtol=1e-2, atol=1e-2), (out, ref)
    print("KERNEL_OK")
</pallas_src>

<mosaic_0001>
module attributes {stable_mosaic.version = 11 : i64} {
  func.func @fused_kernel(%arg0: i32, %arg1: i32, %arg2: memref<2x256xf32, #tpu.memory_space<vmem>>, %arg3: memref<128x9xf32, #tpu.memory_space<vmem>>, %arg4: memref<9x27xf32, #tpu.memory_space<vmem>>, %arg5: memref<128x27xf32, #tpu.memory_space<vmem>>, %arg6: memref<2x128xf32, #tpu.memory_space<vmem>>, %arg7: memref<3x27xf32, #tpu.memory_space<vmem>>, %arg8: memref<27x32xf32, #tpu.memory_space<vmem>>, %arg9: memref<4x32xf32, #tpu.memory_space<vmem>>, %arg10: memref<1x1xf32, #tpu.memory_space<vmem>>, %arg11: memref<2x1xf32, #tpu.memory_space<vmem>>, %arg12: memref<1x1xf32, #tpu.memory_space<vmem>>, %arg13: memref<1x1xf32, #tpu.memory_space<vmem>>, %arg14: memref<1x32xf32, #tpu.memory_space<vmem>>, %arg15: memref<1x32xf32, #tpu.memory_space<vmem>>, %arg16: memref<1x128x32xf32, #tpu.memory_space<vmem>>) attributes {dimension_semantics = [#tpu.dimension_semantics<arbitrary>, #tpu.dimension_semantics<arbitrary>], iteration_bounds = array<i64: 3, 1>, scalar_prefetch = 0 : i64, scratch_operands = 5 : i64, tpu.core_type = #tpu.core_type<tc>, window_params = [{transform_indices = @transform_0, window_bounds = array<i64: 2, 256>}, {transform_indices = @transform_1, window_bounds = array<i64: 128, 9>}, {pipeline_mode = #tpu.pipeline_mode<synchronous>, transform_indices = @transform_2, window_bounds = array<i64: 9, 27>}, {pipeline_mode = #tpu.pipeline_mode<synchronous>, transform_indices = @transform_3, window_bounds = array<i64: 128, 27>}, {pipeline_mode = #tpu.pipeline_mode<synchronous>, transform_indices = @transform_4, window_bounds = array<i64: 2, 128>}, {pipeline_mode = #tpu.pipeline_mode<synchronous>, transform_indices = @transform_5, window_bounds = array<i64: 3, 27>}, {pipeline_mode = #tpu.pipeline_mode<synchronous>, transform_indices = @transform_6, window_bounds = array<i64: 27, 32>}, {pipeline_mode = #tpu.pipeline_mode<synchronous>, transform_indices = @transform_7, window_bounds = array<i64: 4, 32>}, {pipeline_mode = #tpu.pipeline_mode<synchronous>, transform_indices = @transform_8, window_bounds = array<i64: 1, 1>}, {transform_indices = @transform_9, window_bounds = array<i64: 2, 1>}]} {
    %c0_i32 = arith.constant 0 : i32
    %0 = arith.cmpi eq, %arg0, %c0_i32 : i32
    %c0_i32_0 = arith.constant 0 : i32
    %1 = arith.cmpi eq, %arg1, %c0_i32_0 : i32
    %2 = arith.andi %0, %1 : i1
    %3 = arith.extui %2 : i1 to i32
    %c0_i32_1 = arith.constant 0 : i32
    %4 = arith.cmpi ne, %3, %c0_i32_1 : i32
    scf.if %4 {
      %cst = arith.constant 0.000000e+00 : f32
      %14 = vector.broadcast %cst : f32 to vector<1x1xf32>
      %c0 = arith.constant 0 : index
      %c0_6 = arith.constant 0 : index
      %15 = vector.load %arg12[%c0, %c0_6] : memref<1x1xf32, #tpu.memory_space<vmem>>, vector<1x1xf32>
      tpu.vector_store %arg12[%c0, %c0_6], %14 {strides = array<i32>} : memref<1x1xf32, #tpu.memory_space<vmem>>, vector<1x1xf32>,
      %cst_7 = arith.constant 0.000000e+00 : f32
      %16 = vector.broadcast %cst_7 : f32 to vector<1x1xf32>
      %c0_8 = arith.constant 0 : index
      %c0_9 = arith.constant 0 : index
      %17 = vector.load %arg13[%c0_8, %c0_9] : memref<1x1xf32, #tpu.memory_space<vmem>>, vector<1x1xf32>
      tpu.vector_store %arg13[%c0_8, %c0_9], %16 {strides = array<i32>} : memref<1x1xf32, #tpu.memory_space<vmem>>, vector<1x1xf32>,
      %cst_10 = arith.constant 0.000000e+00 : f32
      %18 = vector.broadcast %cst_10 : f32 to vector<1x32xf32>
      %c0_11 = arith.constant 0 : index
      %c0_12 = arith.constant 0 : index
      %19 = vector.load %arg14[%c0_11, %c0_12] : memref<1x32xf32, #tpu.memory_space<vmem>>, vector<1x32xf32>
      tpu.vector_store %arg14[%c0_11, %c0_12], %18 {strides = array<i32>} : memref<1x32xf32, #tpu.memory_space<vmem>>, vector<1x32xf32>,
      %cst_13 = arith.constant 0.000000e+00 : f32
      %20 = vector.broadcast %cst_13 : f32 to vector<1x32xf32>
      %c0_14 = arith.constant 0 : index
      %c0_15 = arith.constant 0 : index
      %21 = vector.load %arg15[%c0_14, %c0_15] : memref<1x32xf32, #tpu.memory_space<vmem>>, vector<1x32xf32>
      tpu.vector_store %arg15[%c0_14, %c0_15], %20 {strides = array<i32>} : memref<1x32xf32, #tpu.memory_space<vmem>>, vector<1x32xf32>,
    } else {
    }
    %c0_i32_2 = arith.constant 0 : i32
    %5 = arith.cmpi eq, %arg0, %c0_i32_2 : i32
    %6 = arith.extui %5 : i1 to i32
    %c0_i32_3 = arith.constant 0 : i32
    %7 = arith.cmpi ne, %6, %c0_i32_3 : i32
    scf.if %7 {
      %c0 = arith.constant 0 : index
      %c0_6 = arith.constant 0 : index
      %14 = vector.load %arg2[%c0, %c0_6] : memref<2x256xf32, #tpu.memory_space<vmem>>, vector<2x256xf32>
      %c0_7 = arith.constant 0 : index
      %c0_8 = arith.constant 0 : index
      %15 = vector.load %arg12[%c0_7, %c0_8] : memref<1x1xf32, #tpu.memory_space<vmem>>, vector<1x1xf32>
      %16 = vector.shape_cast %14 : vector<2x256xf32> to vector<1x2x256xf32>
      %cst = arith.constant dense<0.000000e+00> : vector<1xf32>
      %17 = vector.multi_reduction <add>, %16, %cst [1, 2] : vector<1x2x256xf32> to vector<1xf32>
      %18 = vector.shape_cast %17 : vector<1xf32> to vector<1x1x1xf32>
      %19 = vector.extract %18[0, 0, 0] : f32 from vector<1x1x1xf32>
      %20 = vector.broadcast %19 : f32 to vector<1x1xf32>
      %21 = arith.addf %15, %20 : vector<1x1xf32>
      %c0_9 = arith.constant 0 : index
      %c0_10 = arith.constant 0 : index
      %22 = vector.load %arg12[%c0_9, %c0_10] : memref<1x1xf32, #tpu.memory_space<vmem>>, vector<1x1xf32>
      tpu.vector_store %arg12[%c0_9, %c0_10], %21 {strides = array<i32>} : memref<1x1xf32, #tpu.memory_space<vmem>>, vector<1x1xf32>,
      %c0_11 = arith.constant 0 : index
      %c0_12 = arith.constant 0 : index
      %23 = vector.load %arg13[%c0_11, %c0_12] : memref<1x1xf32, #tpu.memory_space<vmem>>, vector<1x1xf32>
      %24 = arith.mulf %14, %14 : vector<2x256xf32>
      %25 = vector.shape_cast %24 : vector<2x256xf32> to vector<1x2x256xf32>
      %cst_13 = arith.constant dense<0.000000e+00> : vector<1xf32>
      %26 = vector.multi_reduction <add>, %25, %cst_13 [1, 2] : vector<1x2x256xf32> to vector<1xf32>
      %27 = vector.shape_cast %26 : vector<1xf32> to vector<1x1x1xf32>
      %28 = vector.extract %27[0, 0, 0] : f32 from vector<1x1x1xf32>
      %29 = vector.broadcast %28 : f32 to vector<1x1xf32>
      %30 = arith.addf %23, %29 : vector<1x1xf32>
      %c0_14 = arith.constant 0 : index
      %c0_15 = arith.constant 0 : index
      %31 = vector.load %arg13[%c0_14, %c0_15] : memref<1x1xf32, #tpu.memory_space<vmem>>, vector<1x1xf32>
      tpu.vector_store %arg13[%c0_14, %c0_15], %30 {strides = array<i32>} : memref<1x1xf32, #tpu.memory_space<vmem>>, vector<1x1xf32>,
    } else {
    }
    %c1_i32 = arith.constant 1 : i32
    %8 = arith.cmpi eq, %arg0, %c1_i32 : i32
    %9 = arith.extui %8 : i1 to i32
    %c0_i32_4 = arith.constant 0 : i32
    %10 = arith.cmpi ne, %9, %c0_i32_4 : i32
    scf.if %10 {
      %c0 = arith.constant 0 : index
      %c0_6 = arith.constant 0 : index
      %14 = vector.load %arg12[%c0, %c0_6] : memref<1x1xf32, #tpu.memory_space<vmem>>, vector<1x1xf32>
      %cst = arith.constant 0.001953125 : f32
      %15 = vector.broadcast %cst : f32 to vector<1x1xf32>
      %16 = arith.mulf %14, %15 : vector<1x1xf32>
      %c0_7 = arith.constant 0 : index
      %c0_8 = arith.constant 0 : index
      %17 = vector.load %arg13[%c0_7, %c0_8] : memref<1x1xf32, #tpu.memory_space<vmem>>, vector<1x1xf32>
      %cst_9 = arith.constant 0.001953125 : f32
      %18 = vector.broadcast %cst_9 : f32 to vector<1x1xf32>
      %19 = arith.mulf %17, %18 : vector<1x1xf32>
      %20 = arith.mulf %16, %16 : vector<1x1xf32>
      %21 = arith.subf %19, %20 : vector<1x1xf32>
      %c0_10 = arith.constant 0 : index
      %c0_11 = arith.constant 0 : index
      %22 = vector.load %arg7[%c0_10, %c0_11] : memref<3x27xf32, #tpu.memory_space<vmem>>, vector<1x27xf32>
      %c1 = arith.constant 1 : index
      %c0_12 = arith.constant 0 : index
      %23 = vector.load %arg7[%c1, %c0_12] : memref<3x27xf32, #tpu.memory_space<vmem>>, vector<1x27xf32>
      %c2 = arith.constant 2 : index
      %c0_13 = arith.constant 0 : index
      %24 = vector.load %arg7[%c2, %c0_13] : memref<3x27xf32, #tpu.memory_space<vmem>>, vector<1x27xf32>
      %25 = arith.mulf %22, %23 : vector<1x27xf32>
      %26 = arith.mulf %22, %22 : vector<1x27xf32>
      %27 = vector.broadcast %21 : vector<1x1xf32> to vector<1x27xf32>
      %28 = arith.mulf %26, %27 : vector<1x27xf32>
      %cst_14 = arith.constant 9.99999974E-6 : f32
      %29 = vector.broadcast %cst_14 : f32 to vector<1x27xf32>
      %30 = arith.addf %28, %29 : vector<1x27xf32>
      %31 = math.rsqrt %30 : vector<1x27xf32>
      %32 = arith.mulf %25, %31 : vector<1x27xf32>
      %33 = vector.broadcast %16 : vector<1x1xf32> to vector<1x27xf32>
      %34 = arith.mulf %32, %33 : vector<1x27xf32>
      %35 = arith.subf %24, %34 : vector<1x27xf32>
      %c0_15 = arith.constant 0 : index
      %c0_16 = arith.constant 0 : index
      %36 = vector.load %arg3[%c0_15, %c0_16] : memref<128x9xf32, #tpu.memory_space<vmem>>, vector<128x9xf32>
      %c0_17 = arith.constant 0 : index
      %c0_18 = arith.constant 0 : index
      %37 = vector.load %arg4[%c0_17, %c0_18] : memref<9x27xf32, #tpu.memory_space<vmem>>, vector<9x27xf32>
      %38 = vector.broadcast %32 : vector<1x27xf32> to vector<9x27xf32>
      %39 = arith.mulf %37, %38 : vector<9x27xf32>
      %cst_19 = arith.constant dense<0.000000e+00> : vector<128x27xf32>
      %40 = tpu.matmul %36, %39, %cst_19 {dimension_numbers = #tpu.dot_dimension_numbers<[1], [0], [0], [1], [0, 0, 1, 1], [], []>} : vector<128x9xf32>, vector<9x27xf32>, vector<128x27xf32> -> vector<128x27xf32>
      %41 = vector.broadcast %35 : vector<1x27xf32> to vector<128x27xf32>
      %42 = arith.addf %40, %41 : vector<128x27xf32>
      %cst_20 = arith.constant 0.000000e+00 : f32
      %43 = vector.broadcast %cst_20 : f32 to vector<128x27xf32>
      %44 = arith.maximumf %42, %43 : vector<128x27xf32>
      %c0_21 = arith.constant 0 : index
      %c0_22 = arith.constant 0 : index
      %45 = vector.load %arg5[%c0_21, %c0_22] : memref<128x27xf32, #tpu.memory_space<vmem>>, vector<128x27xf32>
      %46 = arith.mulf %44, %45 : vector<128x27xf32>
      %c0_23 = arith.constant 0 : index
      %c0_24 = arith.constant 0 : index
      %47 = vector.load %arg8[%c0_23, %c0_24] : memref<27x32xf32, #tpu.memory_space<vmem>>, vector<27x32xf32>
      %cst_25 = arith.constant dense<0.000000e+00> : vector<128x32xf32>
      %48 = tpu.matmul %46, %47, %cst_25 {dimension_numbers = #tpu.dot_dimension_numbers<[1], [0], [0], [1], [0, 0, 1, 1], [], []>} : vector<128x27xf32>, vector<27x32xf32>, vector<128x32xf32> -> vector<128x32xf32>
      %c0_26 = arith.constant 0 : index
      %c0_27 = arith.constant 0 : index
      %49 = vector.load %arg9[%c0_26, %c0_27] : memref<4x32xf32, #tpu.memory_space<vmem>>, vector<1x32xf32>
      %50 = vector.broadcast %49 : vector<1x32xf32> to vector<128x32xf32>
      %51 = arith.addf %48, %50 : vector<128x32xf32>
      %52 = arith.index_cast %arg1 : i32 to index
      %c0_28 = arith.constant 0 : index
      %c0_29 = arith.constant 0 : index
      %53 = vector.load %arg16[%52, %c0_28, %c0_29] : memref<1x128x32xf32, #tpu.memory_space<vmem>>, vector<1x128x32xf32>
      %54 = vector.shape_cast %53 : vector<1x128x32xf32> to vector<128x32xf32>
      %55 = vector.shape_cast %51 : vector<128x32xf32> to vector<1x128x32xf32>
      tpu.vector_store %arg16[%52, %c0_28, %c0_29], %55 {strides = array<i32>} : memref<1x128x32xf32, #tpu.memory_space<vmem>>, vector<1x128x32xf32>,
      %c0_30 = arith.constant 0 : index
      %c0_31 = arith.constant 0 : index
      %56 = vector.load %arg14[%c0_30, %c0_31] : memref<1x32xf32, #tpu.memory_space<vmem>>, vector<1x32xf32>
      %cst_32 = arith.constant dense<0.000000e+00> : vector<32xf32>
      %57 = vector.multi_reduction <add>, %51, %cst_32 [0] : vector<128x32xf32> to vector<32xf32>
      %58 = vector.shape_cast %57 : vector<32xf32> to vector<1x32xf32>
      %59 = arith.addf %56, %58 : vector<1x32xf32>
      %c0_33 = arith.constant 0 : index
      %c0_34 = arith.constant 0 : index
      %60 = vector.load %arg14[%c0_33, %c0_34] : memref<1x32xf32, #tpu.memory_space<vmem>>, vector<1x32xf32>
      tpu.vector_store %arg14[%c0_33, %c0_34], %59 {strides = array<i32>} : memref<1x32xf32, #tpu.memory_space<vmem>>, vector<1x32xf32>,
      %c0_35 = arith.constant 0 : index
      %c0_36 = arith.constant 0 : index
      %61 = vector.load %arg15[%c0_35, %c0_36] : memref<1x32xf32, #tpu.memory_space<vmem>>, vector<1x32xf32>
      %62 = arith.mulf %51, %51 : vector<128x32xf32>
      %cst_37 = arith.constant dense<0.000000e+00> : vector<32xf32>
      %63 = vector.multi_reduction <add>, %62, %cst_37 [0] : vector<128x32xf32> to vector<32xf32>
      %64 = vector.shape_cast %63 : vector<32xf32> to vector<1x32xf32>
      %65 = arith.addf %61, %64 : vector<1x32xf32>
      %c0_38 = arith.constant 0 : index
      %c0_39 = arith.constant 0 : index
      %66 = vector.load %arg15[%c0_38, %c0_39] : memref<1x32xf32, #tpu.memory_space<vmem>>, vector<1x32xf32>
      tpu.vector_store %arg15[%c0_38, %c0_39], %65 {strides = array<i32>} : memref<1x32xf32, #tpu.memory_space<vmem>>, vector<1x32xf32>,
    } else {
    }
    %c2_i32 = arith.constant 2 : i32
    %11 = arith.cmpi eq, %arg0, %c2_i32 : i32
    %12 = arith.extui %11 : i1 to i32
    %c0_i32_5 = arith.constant 0 : i32
    %13 = arith.cmpi ne, %12, %c0_i32_5 : i32
    scf.if %13 {
      %14 = arith.index_cast %arg1 : i32 to index
      %c0 = arith.constant 0 : index
      %c0_6 = arith.constant 0 : index
      %15 = vector.load %arg16[%14, %c0, %c0_6] : memref<1x128x32xf32, #tpu.memory_space<vmem>>, vector<1x128x32xf32>
      %16 = vector.shape_cast %15 : vector<1x128x32xf32> to vector<128x32xf32>
      %c0_7 = arith.constant 0 : index
      %c0_8 = arith.constant 0 : index
      %17 = vector.load %arg14[%c0_7, %c0_8] : memref<1x32xf32, #tpu.memory_space<vmem>>, vector<1x32xf32>
      %cst = arith.constant 7.812500e-03 : f32
      %18 = vector.broadcast %cst : f32 to vector<1x32xf32>
      %19 = arith.mulf %17, %18 : vector<1x32xf32>
      %c0_9 = arith.constant 0 : index
      %c0_10 = arith.constant 0 : index
      %20 = vector.load %arg15[%c0_9, %c0_10] : memref<1x32xf32, #tpu.memory_space<vmem>>, vector<1x32xf32>
      %cst_11 = arith.constant 7.812500e-03 : f32
      %21 = vector.broadcast %cst_11 : f32 to vector<1x32xf32>
      %22 = arith.mulf %20, %21 : vector<1x32xf32>
      %23 = arith.mulf %19, %19 : vector<1x32xf32>
      %24 = arith.subf %22, %23 : vector<1x32xf32>
      %c1 = arith.constant 1 : index
      %c0_12 = arith.constant 0 : index
      %25 = vector.load %arg9[%c1, %c0_12] : memref<4x32xf32, #tpu.memory_space<vmem>>, vector<1x32xf32>
      %c2 = arith.constant 2 : index
      %c0_13 = arith.constant 0 : index
      %26 = vector.load %arg9[%c2, %c0_13] : memref<4x32xf32, #tpu.memory_space<vmem>>, vector<1x32xf32>
      %27 = vector.broadcast %19 : vector<1x32xf32> to vector<128x32xf32>
      %28 = arith.subf %16, %27 : vector<128x32xf32>
      %cst_14 = arith.constant 9.99999974E-6 : f32
      %29 = vector.broadcast %cst_14 : f32 to vector<1x32xf32>
      %30 = arith.addf %24, %29 : vector<1x32xf32>
      %31 = math.rsqrt %30 : vector<1x32xf32>
      %32 = arith.mulf %25, %31 : vector<1x32xf32>
      %33 = vector.broadcast %32 : vector<1x32xf32> to vector<128x32xf32>
      %34 = arith.mulf %28, %33 : vector<128x32xf32>
      %35 = vector.broadcast %26 : vector<1x32xf32> to vector<128x32xf32>
      %36 = arith.addf %34, %35 : vector<128x32xf32>
      %cst_15 = arith.constant 0.000000e+00 : f32
      %37 = vector.broadcast %cst_15 : f32 to vector<128x32xf32>
      %38 = arith.maximumf %36, %37 : vector<128x32xf32>
      %c0_16 = arith.constant 0 : index
      %c0_17 = arith.constant 0 : index
      %39 = vector.load %arg6[%c0_16, %c0_17] : memref<2x128xf32, #tpu.memory_space<vmem>>, vector<2x128xf32>
      %cst_18 = arith.constant dense<0.000000e+00> : vector<2x32xf32>
      %40 = tpu.matmul %39, %38, %cst_18 {dimension_numbers = #tpu.dot_dimension_numbers<[1], [0], [0], [1], [0, 0, 1, 1], [], []>} : vector<2x128xf32>, vector<128x32xf32>, vector<2x32xf32> -> vector<2x32xf32>
      %c3 = arith.constant 3 : index
      %c0_19 = arith.constant 0 : index
      %41 = vector.load %arg9[%c3, %c0_19] : memref<4x32xf32, #tpu.memory_space<vmem>>, vector<1x32xf32>
      %42 = vector.broadcast %41 : vector<1x32xf32> to vector<2x32xf32>
      %43 = arith.mulf %40, %42 : vector<2x32xf32>
      %cst_20 = arith.constant dense<0.000000e+00> : vector<2xf32>
      %44 = vector.multi_reduction <add>, %43, %cst_20 [1] : vector<2x32xf32> to vector<2xf32>
      %45 = vector.shape_cast %44 : vector<2xf32> to vector<2x1xf32>
      %c0_21 = arith.constant 0 : index
      %c0_22 = arith.constant 0 : index
      %46 = vector.load %arg10[%c0_21, %c0_22] : memref<1x1xf32, #tpu.memory_space<vmem>>, vector<1x1xf32>
      %47 = vector.broadcast %46 : vector<1x1xf32> to vector<2x1xf32>
      %48 = arith.addf %45, %47 : vector<2x1xf32>
      %c0_23 = arith.constant 0 : index
      %c0_24 = arith.constant 0 : index
      %49 = vector.load %arg11[%c0_23, %c0_24] : memref<2x1xf32, #tpu.memory_space<vmem>>, vector<2x1xf32>
      tpu.vector_store %arg11[%c0_23, %c0_24], %48 {strides = array<i32>} : memref<2x1xf32, #tpu.memory_space<vmem>>, vector<2x1xf32>,
    } else {
    }
    return
  }
  func.func @transform_0(%arg0: i32, %arg1: i32) -> (i32, i32) {
    %c0_i32 = arith.constant 0 : i32
    %0 = arith.cmpi eq, %arg0, %c0_i32 : i32
    %c0_i32_0 = arith.constant 0 : i32
    %1 = arith.select %0, %arg1, %c0_i32_0 : i32
    %c0_i32_1 = arith.constant 0 : i32
    %c0_i32_2 = arith.constant 0 : i32
    return %1, %c0_i32_1 : i32, i32
  }
  func.func @transform_1(%arg0: i32, %arg1: i32) -> (i32, i32) {
    %c1_i32 = arith.constant 1 : i32
    %0 = arith.cmpi eq, %arg0, %c1_i32 : i32
    %c0_i32 = arith.constant 0 : i32
    %1 = arith.select %0, %arg1, %c0_i32 : i32
    %c0_i32_0 = arith.constant 0 : i32
    %c0_i32_1 = arith.constant 0 : i32
    return %1, %c0_i32_0 : i32, i32
  }
  func.func @transform_2(%arg0: i32, %arg1: i32) -> (i32, i32) {
    %c0_i32 = arith.constant 0 : i32
    %c0_i32_0 = arith.constant 0 : i32
    %c0_i32_1 = arith.constant 0 : i32
    return %c0_i32, %c0_i32_0 : i32, i32
  }
  func.func @transform_3(%arg0: i32, %arg1: i32) -> (i32, i32) {
    %c0_i32 = arith.constant 0 : i32
    %c0_i32_0 = arith.constant 0 : i32
    %c0_i32_1 = arith.constant 0 : i32
    return %c0_i32, %c0_i32_0 : i32, i32
  }
  func.func @transform_4(%arg0: i32, %arg1: i32) -> (i32, i32) {
    %c0_i32 = arith.constant 0 : i32
    %c0_i32_0 = arith.constant 0 : i32
    %c0_i32_1 = arith.constant 0 : i32
    return %c0_i32, %c0_i32_0 : i32, i32
  }
  func.func @transform_5(%arg0: i32, %arg1: i32) -> (i32, i32) {
    %c0_i32 = arith.constant 0 : i32
    %c0_i32_0 = arith.constant 0 : i32
    %c0_i32_1 = arith.constant 0 : i32
    return %c0_i32, %c0_i32_0 : i32, i32
  }
  func.func @transform_6(%arg0: i32, %arg1: i32) -> (i32, i32) {
    %c0_i32 = arith.constant 0 : i32
    %c0_i32_0 = arith.constant 0 : i32
    %c0_i32_1 = arith.constant 0 : i32
    return %c0_i32, %c0_i32_0 : i32, i32
  }
  func.func @transform_7(%arg0: i32, %arg1: i32) -> (i32, i32) {
    %c0_i32 = arith.constant 0 : i32
    %c0_i32_0 = arith.constant 0 : i32
    %c0_i32_1 = arith.constant 0 : i32
    return %c0_i32, %c0_i32_0 : i32, i32
  }
  func.func @transform_8(%arg0: i32, %arg1: i32) -> (i32, i32) {
    %c0_i32 = arith.constant 0 : i32
    %c0_i32_0 = arith.constant 0 : i32
    %c0_i32_1 = arith.constant 0 : i32
    return %c0_i32, %c0_i32_0 : i32, i32
  }
  func.func @transform_9(%arg0: i32, %arg1: i32) -> (i32, i32) {
    %c2_i32 = arith.constant 2 : i32
    %0 = arith.cmpi eq, %arg0, %c2_i32 : i32
    %c0_i32 = arith.constant 0 : i32
    %1 = arith.select %0, %arg1, %c0_i32 : i32
    %c0_i32_0 = arith.constant 0 : i32
    %c0_i32_1 = arith.constant 0 : i32
    return %1, %c0_i32_0 : i32, i32
  }
}

</mosaic_0001>

<llo_original>
// kernel: tpu_custom_call.1
$region0: #{tpu_custom_call.1}
  #allocation0 [shape = 'u32[]', space=smem, size = 0x4, offset = 0x4, fixed_abs, tag = 'smem constant byte address 0x4 - core index']
  #allocation1 [shape = 'u32[72,128]{1,0:T(1,128)}', space=vmem, size = 0x9000, scoped, tag = 'internal scratch']
  #allocation2 [shape = 'f32[1,1]{1,0:T(1,128)}', space=vmem, size = 0x200, scoped, tag = 'scratch operand']
  #allocation3 [shape = 'f32[1,1]{1,0:T(1,128)}', space=vmem, size = 0x200, scoped, tag = 'scratch operand']
  #allocation4 [shape = 'f32[1,32]{1,0:T(1,128)}', space=vmem, size = 0x200, scoped, tag = 'scratch operand']
  #allocation5 [shape = 'f32[1,32]{1,0:T(1,128)}', space=vmem, size = 0x200, scoped, tag = 'scratch operand']
  #allocation6 [shape = 'f32[1,128,32]{2,1,0:T(8,128)}', space=vmem, size = 0x10000, scoped, tag = 'scratch operand']
  #allocation7 [shape = 'f32[1,1]{1,0:T(1,128)S(1)}', space=vmem, size = 0x200, scoped, tag = 'scoped memory for tpu_custom_call.1']
  %s0 = inlined_call_operand.vmem [shape: f32[2,256], index: 0, kind: input, shape index: {}]
  %s1 = inlined_call_operand.vmem [shape: f32[128,9], index: 1, kind: input, shape index: {}]
  %s2 = inlined_call_operand.vmem [shape: f32[9,27], index: 2, kind: input, shape index: {}]
  %s3 = inlined_call_operand.vmem [shape: f32[128,27], index: 3, kind: input, shape index: {}]
  %s4 = inlined_call_operand.vmem [shape: f32[2,128], index: 4, kind: input, shape index: {}]
  %s5 = inlined_call_operand.vmem [shape: f32[3,27], index: 5, kind: input, shape index: {}]
  %s6 = inlined_call_operand.vmem [shape: f32[27,32], index: 6, kind: input, shape index: {}]
  %s7 = inlined_call_operand.vmem [shape: f32[4,32], index: 7, kind: input, shape index: {}]
  %s8 = inlined_call_operand.<no memory space> [shape: f32[1,1], index: 8, kind: input, shape index: {}]
  %s9 = inlined_call_operand.vmem [shape: f32[2,1], index: 9, kind: output, shape index: {}]
  %s10 = sld [smem:[#allocation0]]
  $region85: #{tpu_custom_call.1} parent=0
    _
  %s12 = ssub.s32 1, %s10
  %s13 = scalar_select 0, %s12, %s10
  %v14 = vstv %s8
  %15 = vst [vmem:[#allocation7] sm:$0x1] %v14
  loop: start=0, step=1, limit=5
  $region2: #{tpu_custom_call.1} parent=0 // loop_pre_header
    _
  $region3: #{tpu_custom_call.1} parent=0 // loop_header
    %s17 = sphi 0, %s21
    %p18 = scmp.ge.s32.totalorder %s17, 5
    %s24 = sphi 0, %s36
    %s25 = sphi 0, %s32
    %s26 = sphi 0, %s24
    %s27 = sphi 0, %s25
    %s28 = sphi 0, %s26
    %s29 = sphi 0, %s27
    %s43 = sphi 0, %s45
    %s46 = sphi 0, %s43
    %s47 = sphi 0, %s46
    %s63 = sphi 0, %s47
    %s73 = sphi 0, %s75
    %s76 = sphi 0, %s73
    %s77 = sphi 0, %s76
    %s93 = sphi 0, %s77
    %s97 = sphi 0, %s97
    %s99 = sphi 0, %s97
    %s100 = sphi 0, %s99
    %s114 = sphi 0, %s100
    %s118 = sphi 0, %s118
    %s120 = sphi 0, %s118
    %s121 = sphi 0, %s120
    %s135 = sphi 0, %s121
    %s139 = sphi 0, %s139
    %s141 = sphi 0, %s139
    %s142 = sphi 0, %s141
    %s156 = sphi 0, %s142
    %s160 = sphi 0, %s160
    %s162 = sphi 0, %s160
    %s163 = sphi 0, %s162
    %s177 = sphi 0, %s163
    %s181 = sphi 0, %s181
    %s183 = sphi 0, %s181
    %s184 = sphi 0, %s183
    %s198 = sphi 0, %s184
    %s202 = sphi 0, %s202
    %s204 = sphi 0, %s202
    %s205 = sphi 0, %s204
    %s219 = sphi 0, %s205
    %s223 = sphi 0, %s223
    %s225 = sphi 0, %s223
    %s226 = sphi 0, %s225
    %s240 = sphi 0, %s226
    %s250 = sphi 0, %s252
    %s253 = sphi 0, %s250
    %s254 = sphi 0, %s253
    %s270 = sphi 0, %s254
  $region4: #{tpu_custom_call.1} parent=0 // loop_header_branch
    %20 = sbr.rel (%p18) target = $region8
  $region5: #{tpu_custom_call.1} parent=0 // loop_body
    %s22 = ssub.s32 %s17, 1
    %s23 = ssub.s32 %s17, 2
    %s30 = sadd.s32 1, %s25
    %p31 = scmp.ge.s32.totalorder %s30, 1
    %s32 = scalar_select %p31, 0, %s30
    %s33 = sadd.s32 1, %s24
    %s34 = scalar_select %p31, %s33, %s24
    %p35 = scmp.ge.s32.totalorder %s34, 3
    %s36 = scalar_select %p35, 0, %s34
    %p37 = scmp.eq.s32.totalorder %s24, 0
    %s38 = scalar_select %p37, %s25, 0
    %p39 = scmp.eq.s32.totalorder %s36, 0
    %s40 = scalar_select %p39, %s32, 0
    %s41 = ssub.s32 %s38, %s40
    %p42 = scmp.eq.s32.totalorder %s41, 0
    %s44 = sadd.s32 %s43, 1
    %s45 = scalar_select %p42, %s43, %s44
    %p48 = pneg %p42
    %p49 = scmp.eq.s32.totalorder %s17, 2
    %p50 = por %p48, %p49
    %p51 = scmp.ne.s32.totalorder %s43, %s46
    %p52 = scmp.eq.s32.totalorder %s17, 0
    %p53 = por %p51, %p52
    %p54 = scmp.ne.s32.totalorder %s43, %s46
    %p55 = scmp.eq.s32.totalorder %s22, 2
    %p56 = por %p54, %p55
    %p57 = scmp.ne.s32.totalorder %s46, %s47
    %p58 = scmp.eq.s32.totalorder %s22, 0
    %p59 = por %p57, %p58
    %p60 = scmp.ne.s32.totalorder %s46, %s47
    %p61 = scmp.eq.s32.totalorder %s23, 2
    %p62 = por %p60, %p61
    %p64 = scmp.ne.s32.totalorder %s47, %s63
    %p65 = scmp.eq.s32.totalorder %s23, 0
    %p66 = por %p64, %p65
    %p67 = scmp.eq.s32.totalorder %s24, 1
    %s68 = scalar_select %p67, %s25, 0
    %p69 = scmp.eq.s32.totalorder %s36, 1
    %s70 = scalar_select %p69, %s32, 0
    %s71 = ssub.s32 %s68, %s70
    %p72 = scmp.eq.s32.totalorder %s71, 0
    %s74 = sadd.s32 %s73, 1
    %s75 = scalar_select %p72, %s73, %s74
    %p78 = pneg %p72
    %p79 = scmp.eq.s32.totalorder %s17, 2
    %p80 = por %p78, %p79
    %p81 = scmp.ne.s32.totalorder %s73, %s76
    %p82 = scmp.eq.s32.totalorder %s17, 0
    %p83 = por %p81, %p82
    %p84 = scmp.ne.s32.totalorder %s73, %s76
    %p85 = scmp.eq.s32.totalorder %s22, 2
    %p86 = por %p84, %p85
    %p87 = scmp.ne.s32.totalorder %s76, %s77
    %p88 = scmp.eq.s32.totalorder %s22, 0
    %p89 = por %p87, %p88
    %p90 = scmp.ne.s32.totalorder %s76, %s77
    %p91 = scmp.eq.s32.totalorder %s23, 2
    %p92 = por %p90, %p91
    %p94 = scmp.ne.s32.totalorder %s77, %s93
    %p95 = scmp.eq.s32.totalorder %s23, 0
    %p96 = por %p94, %p95
    %s98 = sadd.s32 %s97, 1
    %p101 = scmp.eq.s32.totalorder %s17, 2
    %p102 = scmp.ne.s32.totalorder %s97, %s99
    %p103 = scmp.eq.s32.totalorder %s17, 0
    %p104 = por %p102, %p103
    %p105 = scmp.ne.s32.totalorder %s97, %s99
    %p106 = scmp.eq.s32.totalorder %s22, 2
    %p107 = por %p105, %p106
    %p108 = scmp.ne.s32.totalorder %s99, %s100
    %p109 = scmp.eq.s32.totalorder %s22, 0
    %p110 = por %p108, %p109
    %p111 = scmp.ne.s32.totalorder %s99, %s100
    %p112 = scmp.eq.s32.totalorder %s23, 2
    %p113 = por %p111, %p112
    %p115 = scmp.ne.s32.totalorder %s100, %s114
    %p116 = scmp.eq.s32.totalorder %s23, 0
    %p117 = por %p115, %p116
    %s119 = sadd.s32 %s118, 1
    %p122 = scmp.eq.s32.totalorder %s17, 2
    %p123 = scmp.ne.s32.totalorder %s118, %s120
    %p124 = scmp.eq.s32.totalorder %s17, 0
    %p125 = por %p123, %p124
    %p126 = scmp.ne.s32.totalorder %s118, %s120
    %p127 = scmp.eq.s32.totalorder %s22, 2
    %p128 = por %p126, %p127
    %p129 = scmp.ne.s32.totalorder %s120, %s121
    %p130 = scmp.eq.s32.totalorder %s22, 0
    %p131 = por %p129, %p130
    %p132 = scmp.ne.s32.totalorder %s120, %s121
    %p133 = scmp.eq.s32.totalorder %s23, 2
    %p134 = por %p132, %p133
    %p136 = scmp.ne.s32.totalorder %s121, %s135
    %p137 = scmp.eq.s32.totalorder %s23, 0
    %p138 = por %p136, %p137
    %s140 = sadd.s32 %s139, 1
    %p143 = scmp.eq.s32.totalorder %s17, 2
    %p144 = scmp.ne.s32.totalorder %s139, %s141
    %p145 = scmp.eq.s32.totalorder %s17, 0
    %p146 = por %p144, %p145
    %p147 = scmp.ne.s32.totalorder %s139, %s141
    %p148 = scmp.eq.s32.totalorder %s22, 2
    %p149 = por %p147, %p148
    %p150 = scmp.ne.s32.totalorder %s141, %s142
    %p151 = scmp.eq.s32.totalorder %s22, 0
    %p152 = por %p150, %p151
    %p153 = scmp.ne.s32.totalorder %s141, %s142
    %p154 = scmp.eq.s32.totalorder %s23, 2
    %p155 = por %p153, %p154
    %p157 = scmp.ne.s32.totalorder %s142, %s156
    %p158 = scmp.eq.s32.totalorder %s23, 0
    %p159 = por %p157, %p158
    %s161 = sadd.s32 %s160, 1
    %p164 = scmp.eq.s32.totalorder %s17, 2
    %p165 = scmp.ne.s32.totalorder %s160, %s162
    %p166 = scmp.eq.s32.totalorder %s17, 0
    %p167 = por %p165, %p166
    %p168 = scmp.ne.s32.totalorder %s160, %s162
    %p169 = scmp.eq.s32.totalorder %s22, 2
    %p170 = por %p168, %p169
    %p171 = scmp.ne.s32.totalorder %s162, %s163
    %p172 = scmp.eq.s32.totalorder %s22, 0
    %p173 = por %p171, %p172
    %p174 = scmp.ne.s32.totalorder %s162, %s163
    %p175 = scmp.eq.s32.totalorder %s23, 2
    %p176 = por %p174, %p175
    %p178 = scmp.ne.s32.totalorder %s163, %s177
    %p179 = scmp.eq.s32.totalorder %s23, 0
    %p180 = por %p178, %p179
    %s182 = sadd.s32 %s181, 1
    %p185 = scmp.eq.s32.totalorder %s17, 2
    %p186 = scmp.ne.s32.totalorder %s181, %s183
    %p187 = scmp.eq.s32.totalorder %s17, 0
    %p188 = por %p186, %p187
    %p189 = scmp.ne.s32.totalorder %s181, %s183
    %p190 = scmp.eq.s32.totalorder %s22, 2
    %p191 = por %p189, %p190
    %p192 = scmp.ne.s32.totalorder %s183, %s184
    %p193 = scmp.eq.s32.totalorder %s22, 0
    %p194 = por %p192, %p193
    %p195 = scmp.ne.s32.totalorder %s183, %s184
    %p196 = scmp.eq.s32.totalorder %s23, 2
    %p197 = por %p195, %p196
    %p199 = scmp.ne.s32.totalorder %s184, %s198
    %p200 = scmp.eq.s32.totalorder %s23, 0
    %p201 = por %p199, %p200
    %s203 = sadd.s32 %s202, 1
    %p206 = scmp.eq.s32.totalorder %s17, 2
    %p207 = scmp.ne.s32.totalorder %s202, %s204
    %p208 = scmp.eq.s32.totalorder %s17, 0
    %p209 = por %p207, %p208
    %p210 = scmp.ne.s32.totalorder %s202, %s204
    %p211 = scmp.eq.s32.totalorder %s22, 2
    %p212 = por %p210, %p211
    %p213 = scmp.ne.s32.totalorder %s204, %s205
    %p214 = scmp.eq.s32.totalorder %s22, 0
    %p215 = por %p213, %p214
    %p216 = scmp.ne.s32.totalorder %s204, %s205
    %p217 = scmp.eq.s32.totalorder %s23, 2
    %p218 = por %p216, %p217
    %p220 = scmp.ne.s32.totalorder %s205, %s219
    %p221 = scmp.eq.s32.totalorder %s23, 0
    %p222 = por %p220, %p221
    %s224 = sadd.s32 %s223, 1
    %p227 = scmp.eq.s32.totalorder %s17, 2
    %p228 = scmp.ne.s32.totalorder %s223, %s225
    %p229 = scmp.eq.s32.totalorder %s17, 0
    %p230 = por %p228, %p229
    %p231 = scmp.ne.s32.totalorder %s223, %s225
    %p232 = scmp.eq.s32.totalorder %s22, 2
    %p233 = por %p231, %p232
    %p234 = scmp.ne.s32.totalorder %s225, %s226
    %p235 = scmp.eq.s32.totalorder %s22, 0
    %p236 = por %p234, %p235
    %p237 = scmp.ne.s32.totalorder %s225, %s226
    %p238 = scmp.eq.s32.totalorder %s23, 2
    %p239 = por %p237, %p238
    %p241 = scmp.ne.s32.totalorder %s226, %s240
    %p242 = scmp.eq.s32.totalorder %s23, 0
    %p243 = por %p241, %p242
    %p244 = scmp.eq.s32.totalorder %s24, 2
    %s245 = scalar_select %p244, %s25, 0
    %p246 = scmp.eq.s32.totalorder %s36, 2
    %s247 = scalar_select %p246, %s32, 0
    %s248 = ssub.s32 %s245, %s247
    %p249 = scmp.eq.s32.totalorder %s248, 0
    %s251 = sadd.s32 %s250, 1
    %s252 = scalar_select %p249, %s250, %s251
    %p255 = pneg %p249
    %p256 = scmp.eq.s32.totalorder %s17, 2
    %p257 = por %p255, %p256
    %p258 = scmp.ne.s32.totalorder %s250, %s253
    %p259 = scmp.eq.s32.totalorder %s17, 0
    %p260 = por %p258, %p259
    %p261 = scmp.ne.s32.totalorder %s250, %s253
    %p262 = scmp.eq.s32.totalorder %s22, 2
    %p263 = por %p261, %p262
    %p264 = scmp.ne.s32.totalorder %s253, %s254
    %p265 = scmp.eq.s32.totalorder %s22, 0
    %p266 = por %p264, %p265
    %p267 = scmp.ne.s32.totalorder %s253, %s254
    %p268 = scmp.eq.s32.totalorder %s23, 2
    %p269 = por %p267, %p268
    %p271 = scmp.ne.s32.totalorder %s254, %s270
    %p272 = scmp.eq.s32.totalorder %s23, 0
    %p273 = por %p271, %p272
    %p274 = scmp.le.s32.totalorder 1, %s17
    %p275 = scmp.lt.s32.totalorder %s17, 4
    %p276 = pnand %p274, %p275
    %p277 = pneg %p276
    // Predicated region
    $region9: #{tpu_custom_call.1} parent=5 // pred_check
      _
    $region10: #{tpu_custom_call.1} parent=5 // pred_check_branch
      %279 = sbr.rel (%p276) target = $region12
    $region11: #{tpu_custom_call.1} parent=5 // pred_region
      %s280 = ssub.s32 %s17, 1
      // Predicated region
      $region13: #{tpu_custom_call.1} parent=11 // pred_check
        %p281 = pneg %p110
      $region14: #{tpu_custom_call.1} parent=11 // pred_check_branch
        %283 = sbr.rel (%p281) target = $region16
      $region15: #{tpu_custom_call.1} parent=11 // pred_region
        _
      $region16: #{tpu_custom_call.1} parent=11 // pred_fallthru
        _
      // Predicated region
      $region17: #{tpu_custom_call.1} parent=11 // pred_check
        %p284 = pneg %p131
      $region18: #{tpu_custom_call.1} parent=11 // pred_check_branch
        %286 = sbr.rel (%p284) target = $region20
      $region19: #{tpu_custom_call.1} parent=11 // pred_region
        _
      $region20: #{tpu_custom_call.1} parent=11 // pred_fallthru
        _
      // Predicated region
      $region21: #{tpu_custom_call.1} parent=11 // pred_check
        %p287 = pneg %p152
      $region22: #{tpu_custom_call.1} parent=11 // pred_check_branch
        %289 = sbr.rel (%p287) target = $region24
      $region23: #{tpu_custom_call.1} parent=11 // pred_region
        _
      $region24: #{tpu_custom_call.1} parent=11 // pred_fallthru
        _
      // Predicated region
      $region25: #{tpu_custom_call.1} parent=11 // pred_check
        %p290 = pneg %p173
      $region26: #{tpu_custom_call.1} parent=11 // pred_check_branch
        %292 = sbr.rel (%p290) target = $region28
      $region27: #{tpu_custom_call.1} parent=11 // pred_region
        _
      $region28: #{tpu_custom_call.1} parent=11 // pred_fallthru
        _
      // Predicated region
      $region29: #{tpu_custom_call.1} parent=11 // pred_check
        %p293 = pneg %p194
      $region30: #{tpu_custom_call.1} parent=11 // pred_check_branch
        %295 = sbr.rel (%p293) target = $region32
      $region31: #{tpu_custom_call.1} parent=11 // pred_region
        _
      $region32: #{tpu_custom_call.1} parent=11 // pred_fallthru
        _
      // Predicated region
      $region33: #{tpu_custom_call.1} parent=11 // pred_check
        %p296 = pneg %p215
      $region34: #{tpu_custom_call.1} parent=11 // pred_check_branch
        %298 = sbr.rel (%p296) target = $region36
      $region35: #{tpu_custom_call.1} parent=11 // pred_region
        _
      $region36: #{tpu_custom_call.1} parent=11 // pred_fallthru
        _
      // Predicated region
      $region37: #{tpu_custom_call.1} parent=11 // pred_check
        %p299 = pneg %p236
      $region38: #{tpu_custom_call.1} parent=11 // pred_check_branch
        %301 = sbr.rel (%p299) target = $region40
      $region39: #{tpu_custom_call.1} parent=11 // pred_region
        _
      $region40: #{tpu_custom_call.1} parent=11 // pred_fallthru
        _
    $region12: #{tpu_custom_call.1} parent=5 // pred_fallthru
      _
    %p302 = scmp.lt.s32.totalorder %s17, 3
    // Predicated region
    $region41: #{tpu_custom_call.1} parent=5 // pred_check
      %p303 = pneg %p302
    $region42: #{tpu_custom_call.1} parent=5 // pred_check_branch
      %305 = sbr.rel (%p303) target = $region44
    $region43: #{tpu_custom_call.1} parent=5 // pred_region
      // Predicated region
      $region45: #{tpu_custom_call.1} parent=43 // pred_check
        %p306 = pneg %p53
      $region46: #{tpu_custom_call.1} parent=43 // pred_check_branch
        %308 = sbr.rel (%p306) target = $region48
      $region47: #{tpu_custom_call.1} parent=43 // pred_region
        %p309 = scmp.eq.s32.totalorder %s24, 0
        %s310 = scalar_select %p309, %s25, 0
        %p311 = scmp.lt.s32.totalorder %s310, 0
        %s312 = scalar_select %p311, %s310, 0
        %s313 = smul.addr %s312, 2
        %s314 = smul.addr %s313, 2
        %s315 = scalar_lea.vmem %s0, %s314
        %p316 = scmp.eq.s32.totalorder %s24, 0
        %s317 = scalar_select %p316, %s25, 0
      $region48: #{tpu_custom_call.1} parent=43 // pred_fallthru
        _
      // Predicated region
      $region49: #{tpu_custom_call.1} parent=43 // pred_check
        %p318 = pneg %p83
      $region50: #{tpu_custom_call.1} parent=43 // pred_check_branch
        %320 = sbr.rel (%p318) target = $region52
      $region51: #{tpu_custom_call.1} parent=43 // pred_region
        %p321 = scmp.eq.s32.totalorder %s24, 1
        %s322 = scalar_select %p321, %s25, 0
        %s323 = smul.u32 16, %s322
        %p324 = scmp.lt.s32.totalorder %s323, 15
        %s325 = scalar_select %p324, %s323, 15
        %s326 = smul.addr %s325, 8
        %s327 = scalar_lea.vmem %s1, %s326
        %p328 = scmp.eq.s32.totalorder %s24, 1
        %s329 = scalar_select %p328, %s25, 0
        %s330 = smul.u32 16, %s329
      $region52: #{tpu_custom_call.1} parent=43 // pred_fallthru
        _
    $region44: #{tpu_custom_call.1} parent=5 // pred_fallthru
      _
    %p331 = scmp.le.s32.totalorder 1, %s17
    %p332 = scmp.lt.s32.totalorder %s17, 4
    %p333 = pnand %p331, %p332
    %p334 = pneg %p333
    // Predicated region
    $region53: #{tpu_custom_call.1} parent=5 // pred_check
      _
    $region54: #{tpu_custom_call.1} parent=5 // pred_check_branch
      %336 = sbr.rel (%p333) target = $region56
    $region55: #{tpu_custom_call.1} parent=5 // pred_region
      %s337 = ssub.s32 %s17, 1
      %p338 = scmp.eq.s32.totalorder %s26, 0
      %s339 = scalar_select %p338, %s27, 0
      %p340 = scmp.lt.s32.totalorder %s339, 0
      %s341 = scalar_select %p340, %s339, 0
      %s342 = smul.addr %s341, 2
      %s343 = smul.addr %s342, 2
      %s344 = scalar_lea.vmem %s0, %s343
      %p345 = pneg %p59
      %p346 = pneg %p56
      %p347 = scmp.eq.s32.totalorder %s26, 1
      %s348 = scalar_select %p347, %s27, 0
      %s349 = smul.u32 16, %s348
      %p350 = scmp.lt.s32.totalorder %s349, 15
      %s351 = scalar_select %p350, %s349, 15
      %s352 = smul.addr %s351, 8
      %s353 = scalar_lea.vmem %s1, %s352
      %p354 = pneg %p89
      %p355 = pneg %p86
      %p356 = pneg %p110
      %p357 = pneg %p107
      %p358 = pneg %p131
      %p359 = pneg %p128
      %p360 = pneg %p152
      %p361 = pneg %p149
      %p362 = pneg %p173
      %p363 = pneg %p170
      %p364 = pneg %p194
      %p365 = pneg %p191
      %p366 = pneg %p215
      %p367 = pneg %p212
      %p368 = pneg %p236
      %p369 = pneg %p233
      %p370 = pneg %p266
      %p371 = pneg %p263
      %p372 = scmp.eq.s32.totalorder %s26, 2
      %s373 = scalar_select %p372, %s27, 0
      %p374 = scmp.lt.s32.totalorder %s373, 0
      %s375 = scalar_select %p374, %s373, 0
      %s376 = smul.addr %s375, 2
      %s377 = scalar_lea.vmem %s9, %s376
      %p378 = scmp.eq.s32.totalorder %s26, 0
      %s379 = scalar_select %p378, %s27, 0
      %p380 = scmp.lt.s32.totalorder %s379, 0
      %s381 = scalar_select %p380, %s379, 0
      %s382 = smul.addr %s381, 2
      %s383 = smul.addr %s382, 2
      %s384 = scalar_lea.vmem %s0, %s383
      %p385 = scmp.eq.s32.totalorder %s26, 0
      %s386 = scalar_select %p385, %s27, 0
      %p387 = scmp.eq.s32.totalorder %s26, 1
      %s388 = scalar_select %p387, %s27, 0
      %s389 = smul.u32 16, %s388
      %p390 = scmp.lt.s32.totalorder %s389, 15
      %s391 = scalar_select %p390, %s389, 15
      %s392 = smul.addr %s391, 8
      %s393 = scalar_lea.vmem %s1, %s392
      %p394 = scmp.eq.s32.totalorder %s26, 1
      %s395 = scalar_select %p394, %s27, 0
      %s396 = smul.u32 16, %s395
      %p397 = scmp.eq.s32.totalorder %s26, 2
      %s398 = scalar_select %p397, %s27, 0
      %p399 = scmp.lt.s32.totalorder %s398, 0
      %s400 = scalar_select %p399, %s398, 0
      %s401 = smul.addr %s400, 2
      %s402 = scalar_lea.vmem %s9, %s401
      %p403 = scmp.eq.s32.totalorder %s26, 2
      %s404 = scalar_select %p403, %s27, 0
      %p405 = scmp.eq.s32.totalorder %s26, 0
      %p406 = scmp.eq.s32.totalorder %s27, 0
      %p407 = pnand %p405, %p406
      %p408 = pneg %p407
      // Predicated region
      $region57: #{tpu_custom_call.1} parent=55 // pred_check
        _
      $region58: #{tpu_custom_call.1} parent=55 // pred_check_branch
        %410 = sbr.rel (%p407) target = $region60
      $region59: #{tpu_custom_call.1} parent=55 // pred_region
        %vm411 = vcmask 0
        %412 = vst.msk [vmem:[#allocation2] sm:$0x1] %vm411, 0.0
        %413 = vst.msk [vmem:[#allocation3] sm:$0x1] %vm411, 0.0
        %vm414 = vcmask 253952
        %415 = vst.msk [vmem:[#allocation4] sm:$0x1] %vm414, 0.0
        %416 = vst.msk [vmem:[#allocation5] sm:$0x1] %vm414, 0.0
      $region60: #{tpu_custom_call.1} parent=55 // pred_fallthru
        _
      // Predicated region
      $region61: #{tpu_custom_call.1} parent=55 // pred_check
        %p417 = pneg %p405
      $region62: #{tpu_custom_call.1} parent=55 // pred_check_branch
        %419 = sbr.rel (%p417) target = $region64
      $region63: #{tpu_custom_call.1} parent=55 // pred_region
        %v420 = vld [vmem:[%s384] sm:$0xf]
        %v421 = vld [vmem:[#allocation2] sm:$0x1]
        %423 = vst [vmem:[#allocation1] ss:$4 sm:$0xff] %v420
        %v424 = vld.sshfl [vmem:[#allocation1] sm:$0xff pattern:$0x73625140]
        %v425 = vld.sshfl [vmem:[#allocation1 + $0x8] sm:$0xff pattern:$0x73625140]
        %vm428 = vcmask 1041408
        %v429 = vsel %vm428, %v424, 0.0
        %v430 = vsel %vm428, %v425, 0.0
        %v431 = vadd.f32 %v429, %v430
        %432 = vadd.xlane.f32.xlu0 %v431
        %v433 = vpop.xlane.xlu0 %432
        %v434 = vrot.slane %v433, 4
        %v435 = vadd.f32 %v433, %v434
        %v436 = vrot.slane %v435, 2
        %v437 = vadd.f32 %v435, %v436
        %v438 = vrot.slane %v437, 1
        %v439 = vadd.f32 %v437, %v438
        %s440 = vtos %v439
        %v441 = vstv %s440
        %v442 = vadd.f32 %v421, %v441
        %vm443 = vcmask 0
        %444 = vst.msk [vmem:[#allocation2] sm:$0x1] %vm443, %v442
        %v445 = vld [vmem:[#allocation3] sm:$0x1]
        %v446 = vmul.f32 %v420, %v420
        %448 = vst [vmem:[#allocation1] ss:$4 sm:$0xff] %v446
        %v449 = vld.sshfl [vmem:[#allocation1] sm:$0xff pattern:$0x73625140]
        %v450 = vld.sshfl [vmem:[#allocation1 + $0x8] sm:$0xff pattern:$0x73625140]
        %v453 = vsel %vm428, %v449, 0.0
        %v454 = vsel %vm428, %v450, 0.0
        %v455 = vadd.f32 %v453, %v454
        %456 = vadd.xlane.f32.xlu0 %v455
        %v457 = vpop.xlane.xlu0 %456
        %v458 = vrot.slane %v457, 4
        %v459 = vadd.f32 %v457, %v458
        %v460 = vrot.slane %v459, 2
        %v461 = vadd.f32 %v459, %v460
        %v462 = vrot.slane %v461, 1
        %v463 = vadd.f32 %v461, %v462
        %s464 = vtos %v463
        %v465 = vstv %s464
        %v466 = vadd.f32 %v445, %v465
        %467 = vst.msk [vmem:[#allocation3] sm:$0x1] %vm443, %v466
      $region64: #{tpu_custom_call.1} parent=55 // pred_fallthru
        _
      %p468 = scmp.eq.s32.totalorder %s26, 1
      // Predicated region
      $region65: #{tpu_custom_call.1} parent=55 // pred_check
        %p469 = pneg %p468
      $region66: #{tpu_custom_call.1} parent=55 // pred_check_branch
        %471 = sbr.rel (%p469) target = $region68
      $region67: #{tpu_custom_call.1} parent=55 // pred_region
        %v472 = vld [vmem:[#allocation2] sm:$0x1]
        %v473 = vmul.f32 %v472, 0.001953125
        %v474 = vld [vmem:[#allocation3] sm:$0x1]
        %v475 = vmul.f32 %v474, 0.001953125
        %v476 = vmul.f32 %v473, %v473
        %v477 = vsub.f32 %v475, %v476
        %v478 = vld [vmem:[%s5] sm:$0x1]
        %v479 = vld [vmem:[%s5 + $0x1] sm:$0x1]
        %v480 = vld [vmem:[%s5 + $0x2] sm:$0x1]
        %v481 = vmul.f32 %v478, %v479
        %v482 = vmul.f32 %v478, %v478
        %484 = vset.pattern.permute.xlu0 0
        %485 = vperm.xlu0 %484, %v477
        %v486 = vpop.permute.xlu0 %485
        %v488 = vperm.slane %v486, 0
        %v489 = vmul.f32 %v482, %v488
        %v490 = vadd.f32 %v489, 1e-05
        %v491 = vrsqrt.pop %v490
        %v492 = vmul.f32 %v491, %v490
        %v493 = vmul.f32 %v492, %v491
        %v494 = vmul.f32 0.5, %v493
        %v495 = vsub.f32 1.5, %v494
        %v496 = vmul.f32 %v491, %v495
        %vm497 = vweird.f32 %v490
        %vm498 = vweird.f32 %v491
        %vm499 = vmor %vm497, %vm498
        %v500 = vsel %vm499, %v491, %v496
        %v501 = vmul.f32 %v481, %v500
        %503 = vset.pattern.permute.xlu0 0
        %504 = vperm.xlu0 %503, %v473
        %v505 = vpop.permute.xlu0 %504
        %v507 = vperm.slane %v505, 0
        %v508 = vmul.f32 %v501, %v507
        %v509 = vsub.f32 %v480, %v508
        %v510 = vld [vmem:[%s393] sm:$0xff]
        %v511 = vld [vmem:[%s393 + $0x8] sm:$0xff]
        %v512 = vld [vmem:[%s393 + $0x10] sm:$0xff]
        %v513 = vld [vmem:[%s393 + $0x18] sm:$0xff]
        %v514 = vld [vmem:[%s393 + $0x20] sm:$0xff]
        %v515 = vld [vmem:[%s393 + $0x28] sm:$0xff]
        %v516 = vld [vmem:[%s393 + $0x30] sm:$0xff]
        %v517 = vld [vmem:[%s393 + $0x38] sm:$0xff]
        %v518 = vld [vmem:[%s393 + $0x40] sm:$0xff]
        %v519 = vld [vmem:[%s393 + $0x48] sm:$0xff]
        %v520 = vld [vmem:[%s393 + $0x50] sm:$0xff]
        %v521 = vld [vmem:[%s393 + $0x58] sm:$0xff]
        %v522 = vld [vmem:[%s393 + $0x60] sm:$0xff]
        %v523 = vld [vmem:[%s393 + $0x68] sm:$0xff]
        %v524 = vld [vmem:[%s393 + $0x70] sm:$0xff]
        %v525 = vld [vmem:[%s393 + $0x78] sm:$0xff]
        %v526 = vld [vmem:[%s2] sm:$0xff]
        %v527 = vld [vmem:[%s2 + $0x8] sm:$0x1]
        %v528 = vperm.slane %v501, 0
        %v529 = vmul.f32 %v526, %v528
        %v530 = vmul.f32 %v527, %v528
        %v531 = vperm.slane %v509, 0
        %vm532 = vcmask 72704
        %v534 = vsel %vm532, %v510, 0
        %v537 = vsel %vm532, %v511, 0
        %v540 = vsel %vm532, %v512, 0
        %v543 = vsel %vm532, %v513, 0
        %v546 = vsel %vm532, %v514, 0
        %v549 = vsel %vm532, %v515, 0
        %v552 = vsel %vm532, %v516, 0
        %v555 = vsel %vm532, %v517, 0
        %v558 = vsel %vm532, %v518, 0
        %v561 = vsel %vm532, %v519, 0
        %v564 = vsel %vm532, %v520, 0
        %v567 = vsel %vm532, %v521, 0
        %v570 = vsel %vm532, %v522, 0
        %v573 = vsel %vm532, %v523, 0
        %v576 = vsel %vm532, %v524, 0
        %v579 = vsel %vm532, %v525, 0
        %vm581 = vcmask 1040384
        %v583 = vsel %vm581, %v530, 0
        %585 = vmatpush.msra.mxu0 0.0
        %586 = vmatpush.msra.mxu0 0.0
        %587 = vmatpush.msra.mxu0 0.0
        %588 = vmatpush.msra.mxu0 0.0
        %589 = vmatpush.msra.mxu0 0.0
        %590 = vmatpush.msra.mxu0 0.0
        %591 = vmatpush.msra.mxu0 0.0
        %592 = vmatpush.msra.mxu0 0.0
        %593 = vmatpush.msra.mxu0 0.0
        %594 = vmatpush.msra.mxu0 0.0
        %595 = vmatpush.msra.mxu0 0.0
        %596 = vmatpush.msra.mxu0 0.0
        %597 = vmatpush.msra.mxu0 0.0
        %598 = vmatpush.msra.mxu0 0.0
        %599 = vmatpush.msra.mxu0 %v583
        %600 = vmatpush.msra.mxu0 %v529
        %601 = vmatmul.f32.gmra.mxu0 %v534
        %v602 = vpop.f32.mrf.mxu0
        %v603 = vadd.f32 %v531, %v602
        %604 = vmatmul.f32.gmra.mxu0 %v537
        %v605 = vpop.f32.mrf.mxu0
        %v606 = vadd.f32 %v531, %v605
        %607 = vmatmul.f32.gmra.mxu0 %v540
        %v608 = vpop.f32.mrf.mxu0
        %v609 = vadd.f32 %v531, %v608
        %610 = vmatmul.f32.gmra.mxu0 %v543
        %v611 = vpop.f32.mrf.mxu0
        %v612 = vadd.f32 %v531, %v611
        %613 = vmatmul.f32.gmra.mxu0 %v546
        %v614 = vpop.f32.mrf.mxu0
        %v615 = vadd.f32 %v531, %v614
        %616 = vmatmul.f32.gmra.mxu0 %v549
        %v617 = vpop.f32.mrf.mxu0
        %v618 = vadd.f32 %v531, %v617
        %619 = vmatmul.f32.gmra.mxu0 %v552
        %v620 = vpop.f32.mrf.mxu0
        %v621 = vadd.f32 %v531, %v620
        %622 = vmatmul.f32.gmra.mxu0 %v555
        %v623 = vpop.f32.mrf.mxu0
        %v624 = vadd.f32 %v531, %v623
        %625 = vmatmul.f32.gmra.mxu0 %v558
        %v626 = vpop.f32.mrf.mxu0
        %v627 = vadd.f32 %v531, %v626
        %628 = vmatmul.f32.gmra.mxu0 %v561
        %v629 = vpop.f32.mrf.mxu0
        %v630 = vadd.f32 %v531, %v629
        %631 = vmatmul.f32.gmra.mxu0 %v564
        %v632 = vpop.f32.mrf.mxu0
        %v633 = vadd.f32 %v531, %v632
        %634 = vmatmul.f32.gmra.mxu0 %v567
        %v635 = vpop.f32.mrf.mxu0
        %v636 = vadd.f32 %v531, %v635
        %637 = vmatmul.f32.gmra.mxu0 %v570
        %v638 = vpop.f32.mrf.mxu0
        %v639 = vadd.f32 %v531, %v638
        %640 = vmatmul.f32.gmra.mxu0 %v573
        %v641 = vpop.f32.mrf.mxu0
        %v642 = vadd.f32 %v531, %v641
        %643 = vmatmul.f32.gmra.mxu0 %v576
        %v644 = vpop.f32.mrf.mxu0
        %v645 = vadd.f32 %v531, %v644
        %646 = vmatmul.f32.gmra.mxu0 %v579
        %v647 = vpop.f32.mrf.mxu0
        %v648 = vadd.f32 %v531, %v647
        %649 = vdwg.mxu0
        %v650 = vmax.f32 %v603, 0.0
        %v651 = vmax.f32 %v606, 0.0
        %v652 = vmax.f32 %v609, 0.0
        %v653 = vmax.f32 %v612, 0.0
        %v654 = vmax.f32 %v615, 0.0
        %v655 = vmax.f32 %v618, 0.0
        %v656 = vmax.f32 %v621, 0.0
        %v657 = vmax.f32 %v624, 0.0
        %v658 = vmax.f32 %v627, 0.0
        %v659 = vmax.f32 %v630, 0.0
        %v660 = vmax.f32 %v633, 0.0
        %v661 = vmax.f32 %v636, 0.0
        %v662 = vmax.f32 %v639, 0.0
        %v663 = vmax.f32 %v642, 0.0
        %v664 = vmax.f32 %v645, 0.0
        %v665 = vmax.f32 %v648, 0.0
        %v666 = vld [vmem:[%s3] sm:$0xff]
        %v667 = vld [vmem:[%s3 + $0x8] sm:$0xff]
        %v668 = vld [vmem:[%s3 + $0x10] sm:$0xff]
        %v669 = vld [vmem:[%s3 + $0x18] sm:$0xff]
        %v670 = vld [vmem:[%s3 + $0x20] sm:$0xff]
        %v671 = vld [vmem:[%s3 + $0x28] sm:$0xff]
        %v672 = vld [vmem:[%s3 + $0x30] sm:$0xff]
        %v673 = vld [vmem:[%s3 + $0x38] sm:$0xff]
        %v674 = vld [vmem:[%s3 + $0x40] sm:$0xff]
        %v675 = vld [vmem:[%s3 + $0x48] sm:$0xff]
        %v676 = vld [vmem:[%s3 + $0x50] sm:$0xff]
        %v677 = vld [vmem:[%s3 + $0x58] sm:$0xff]
        %v678 = vld [vmem:[%s3 + $0x60] sm:$0xff]
        %v679 = vld [vmem:[%s3 + $0x68] sm:$0xff]
        %v680 = vld [vmem:[%s3 + $0x70] sm:$0xff]
        %v681 = vld [vmem:[%s3 + $0x78] sm:$0xff]
        %v682 = vmul.f32 %v650, %v666
        %v683 = vmul.f32 %v651, %v667
        %v684 = vmul.f32 %v652, %v668
        %v685 = vmul.f32 %v653, %v669
        %v686 = vmul.f32 %v654, %v670
        %v687 = vmul.f32 %v655, %v671
        %v688 = vmul.f32 %v656, %v672
        %v689 = vmul.f32 %v657, %v673
        %v690 = vmul.f32 %v658, %v674
        %v691 = vmul.f32 %v659, %v675
        %v692 = vmul.f32 %v660, %v676
        %v693 = vmul.f32 %v661, %v677
        %v694 = vmul.f32 %v662, %v678
        %v695 = vmul.f32 %v663, %v679
        %v696 = vmul.f32 %v664, %v680
        %v697 = vmul.f32 %v665, %v681
        %v698 = vld [vmem:[%s6] sm:$0xff]
        %v699 = vld [vmem:[%s6 + $0x8] sm:$0xff]
        %v700 = vld [vmem:[%s6 + $0x10] sm:$0xff]
        %v701 = vld [vmem:[%s6 + $0x18] sm:$0x7]
        %v702 = vld [vmem:[%s7] sm:$0x1]
        %v703 = vperm.slane %v702, 0
        %vm704 = vcmask 220160
        %v706 = vsel %vm704, %v682, 0
        %v709 = vsel %vm704, %v683, 0
        %v712 = vsel %vm704, %v684, 0
        %v715 = vsel %vm704, %v685, 0
        %v718 = vsel %vm704, %v686, 0
        %v721 = vsel %vm704, %v687, 0
        %v724 = vsel %vm704, %v688, 0
        %v727 = vsel %vm704, %v689, 0
        %v730 = vsel %vm704, %v690, 0
        %v733 = vsel %vm704, %v691, 0
        %v736 = vsel %vm704, %v692, 0
        %v739 = vsel %vm704, %v693, 0
        %v742 = vsel %vm704, %v694, 0
        %v745 = vsel %vm704, %v695, 0
        %v748 = vsel %vm704, %v696, 0
        %v751 = vsel %vm704, %v697, 0
        %vm753 = vcmask 1042432
        %v755 = vsel %vm753, %v701, 0
        %757 = vmatpush.msra.mxu0 0.0
        %758 = vmatpush.msra.mxu0 0.0
        %759 = vmatpush.msra.mxu0 0.0
        %760 = vmatpush.msra.mxu0 0.0
        %761 = vmatpush.msra.mxu0 0.0
        %762 = vmatpush.msra.mxu0 0.0
        %763 = vmatpush.msra.mxu0 0.0
        %764 = vmatpush.msra.mxu0 0.0
        %765 = vmatpush.msra.mxu0 0.0
        %766 = vmatpush.msra.mxu0 0.0
        %767 = vmatpush.msra.mxu0 0.0
        %768 = vmatpush.msra.mxu0 0.0
        %769 = vmatpush.msra.mxu0 %v755
        %770 = vmatpush.msra.mxu0 %v700
        %771 = vmatpush.msra.mxu0 %v699
        %772 = vmatpush.msra.mxu0 %v698
        %773 = vmatmul.f32.gmra.mxu0 %v706
        %v774 = vpop.f32.mrf.mxu0
        %v775 = vadd.f32 %v703, %v774
        %776 = vmatmul.f32.gmra.mxu0 %v709
        %v777 = vpop.f32.mrf.mxu0
        %v778 = vadd.f32 %v703, %v777
        %779 = vmatmul.f32.gmra.mxu0 %v712
        %v780 = vpop.f32.mrf.mxu0
        %v781 = vadd.f32 %v703, %v780
        %782 = vmatmul.f32.gmra.mxu0 %v715
        %v783 = vpop.f32.mrf.mxu0
        %v784 = vadd.f32 %v703, %v783
        %785 = vmatmul.f32.gmra.mxu0 %v718
        %v786 = vpop.f32.mrf.mxu0
        %v787 = vadd.f32 %v703, %v786
        %788 = vmatmul.f32.gmra.mxu0 %v721
        %v789 = vpop.f32.mrf.mxu0
        %v790 = vadd.f32 %v703, %v789
        %791 = vmatmul.f32.gmra.mxu0 %v724
        %v792 = vpop.f32.mrf.mxu0
        %v793 = vadd.f32 %v703, %v792
        %794 = vmatmul.f32.gmra.mxu0 %v727
        %v795 = vpop.f32.mrf.mxu0
        %v796 = vadd.f32 %v703, %v795
        %797 = vmatmul.f32.gmra.mxu0 %v730
        %v798 = vpop.f32.mrf.mxu0
        %v799 = vadd.f32 %v703, %v798
        %800 = vmatmul.f32.gmra.mxu0 %v733
        %v801 = vpop.f32.mrf.mxu0
        %v802 = vadd.f32 %v703, %v801
        %803 = vmatmul.f32.gmra.mxu0 %v736
        %v804 = vpop.f32.mrf.mxu0
        %v805 = vadd.f32 %v703, %v804
        %806 = vmatmul.f32.gmra.mxu0 %v739
        %v807 = vpop.f32.mrf.mxu0
        %v808 = vadd.f32 %v703, %v807
        %809 = vmatmul.f32.gmra.mxu0 %v742
        %v810 = vpop.f32.mrf.mxu0
        %v811 = vadd.f32 %v703, %v810
        %812 = vmatmul.f32.gmra.mxu0 %v745
        %v813 = vpop.f32.mrf.mxu0
        %v814 = vadd.f32 %v703, %v813
        %815 = vmatmul.f32.gmra.mxu0 %v748
        %v816 = vpop.f32.mrf.mxu0
        %v817 = vadd.f32 %v703, %v816
        %818 = vmatmul.f32.gmra.mxu0 %v751
        %v819 = vpop.f32.mrf.mxu0
        %v820 = vadd.f32 %v703, %v819
        %821 = vdwg.mxu0
        %s822 = smul.u32 %s27, 128
        %s823 = scalar_lea.vmem [#allocation6], %s822
        %vm824 = vcmask 261120
        %825 = vst.msk [vmem:[%s823] sm:$0xff] %vm824, %v775
        %826 = vst.msk [vmem:[%s823 + $0x8] sm:$0xff] %vm824, %v778
        %827 = vst.msk [vmem:[%s823 + $0x10] sm:$0xff] %vm824, %v781
        %828 = vst.msk [vmem:[%s823 + $0x18] sm:$0xff] %vm824, %v784
        %829 = vst.msk [vmem:[%s823 + $0x20] sm:$0xff] %vm824, %v787
        %830 = vst.msk [vmem:[%s823 + $0x28] sm:$0xff] %vm824, %v790
        %831 = vst.msk [vmem:[%s823 + $0x30] sm:$0xff] %vm824, %v793
        %832 = vst.msk [vmem:[%s823 + $0x38] sm:$0xff] %vm824, %v796
        %833 = vst.msk [vmem:[%s823 + $0x40] sm:$0xff] %vm824, %v799
        %834 = vst.msk [vmem:[%s823 + $0x48] sm:$0xff] %vm824, %v802
        %835 = vst.msk [vmem:[%s823 + $0x50] sm:$0xff] %vm824, %v805
        %836 = vst.msk [vmem:[%s823 + $0x58] sm:$0xff] %vm824, %v808
        %837 = vst.msk [vmem:[%s823 + $0x60] sm:$0xff] %vm824, %v811
        %838 = vst.msk [vmem:[%s823 + $0x68] sm:$0xff] %vm824, %v814
        %839 = vst.msk [vmem:[%s823 + $0x70] sm:$0xff] %vm824, %v817
        %840 = vst.msk [vmem:[%s823 + $0x78] sm:$0xff] %vm824, %v820
        %v841 = vld [vmem:[#allocation4] sm:$0x1]
        %v842 = vsel %vm824, %v775, 0.0
        %v843 = vsel %vm824, %v778, 0.0
        %v844 = vadd.f32 %v842, %v843
        %v845 = vsel %vm824, %v781, 0.0
        %v846 = vadd.f32 %v844, %v845
        %v847 = vsel %vm824, %v784, 0.0
        %v848 = vadd.f32 %v846, %v847
        %v849 = vsel %vm824, %v787, 0.0
        %v850 = vadd.f32 %v848, %v849
        %v851 = vsel %vm824, %v790, 0.0
        %v852 = vadd.f32 %v850, %v851
        %v853 = vsel %vm824, %v793, 0.0
        %v854 = vadd.f32 %v852, %v853
        %v855 = vsel %vm824, %v796, 0.0
        %v856 = vadd.f32 %v854, %v855
        %v857 = vsel %vm824, %v799, 0.0
        %v858 = vadd.f32 %v856, %v857
        %v859 = vsel %vm824, %v802, 0.0
        %v860 = vadd.f32 %v858, %v859
        %v861 = vsel %vm824, %v805, 0.0
        %v862 = vadd.f32 %v860, %v861
        %v863 = vsel %vm824, %v808, 0.0
        %v864 = vadd.f32 %v862, %v863
        %v865 = vsel %vm824, %v811, 0.0
        %v866 = vadd.f32 %v864, %v865
        %v867 = vsel %vm824, %v814, 0.0
        %v868 = vadd.f32 %v866, %v867
        %v869 = vsel %vm824, %v817, 0.0
        %v870 = vadd.f32 %v868, %v869
        %v871 = vsel %vm824, %v820, 0.0
        %v872 = vadd.f32 %v870, %v871
        %v873 = vrot.slane %v872, 4
        %v874 = vadd.f32 %v872, %v873
        %v875 = vrot.slane %v874, 2
        %v876 = vadd.f32 %v874, %v875
        %v877 = vrot.slane %v876, 1
        %v878 = vadd.f32 %v876, %v877
        %v879 = vadd.f32 %v841, %v878
        %vm880 = vcmask 253952
        %881 = vst.msk [vmem:[#allocation4] sm:$0x1] %vm880, %v879
        %v882 = vld [vmem:[#allocation5] sm:$0x1]
        %v883 = vmul.f32 %v775, %v775
        %v884 = vmul.f32 %v778, %v778
        %v885 = vmul.f32 %v781, %v781
        %v886 = vmul.f32 %v784, %v784
        %v887 = vmul.f32 %v787, %v787
        %v888 = vmul.f32 %v790, %v790
        %v889 = vmul.f32 %v793, %v793
        %v890 = vmul.f32 %v796, %v796
        %v891 = vmul.f32 %v799, %v799
        %v892 = vmul.f32 %v802, %v802
        %v893 = vmul.f32 %v805, %v805
        %v894 = vmul.f32 %v808, %v808
        %v895 = vmul.f32 %v811, %v811
        %v896 = vmul.f32 %v814, %v814
        %v897 = vmul.f32 %v817, %v817
        %v898 = vmul.f32 %v820, %v820
        %v899 = vsel %vm824, %v883, 0.0
        %v900 = vsel %vm824, %v884, 0.0
        %v901 = vadd.f32 %v899, %v900
        %v902 = vsel %vm824, %v885, 0.0
        %v903 = vadd.f32 %v901, %v902
        %v904 = vsel %vm824, %v886, 0.0
        %v905 = vadd.f32 %v903, %v904
        %v906 = vsel %vm824, %v887, 0.0
        %v907 = vadd.f32 %v905, %v906
        %v908 = vsel %vm824, %v888, 0.0
        %v909 = vadd.f32 %v907, %v908
        %v910 = vsel %vm824, %v889, 0.0
        %v911 = vadd.f32 %v909, %v910
        %v912 = vsel %vm824, %v890, 0.0
        %v913 = vadd.f32 %v911, %v912
        %v914 = vsel %vm824, %v891, 0.0
        %v915 = vadd.f32 %v913, %v914
        %v916 = vsel %vm824, %v892, 0.0
        %v917 = vadd.f32 %v915, %v916
        %v918 = vsel %vm824, %v893, 0.0
        %v919 = vadd.f32 %v917, %v918
        %v920 = vsel %vm824, %v894, 0.0
        %v921 = vadd.f32 %v919, %v920
        %v922 = vsel %vm824, %v895, 0.0
        %v923 = vadd.f32 %v921, %v922
        %v924 = vsel %vm824, %v896, 0.0
        %v925 = vadd.f32 %v923, %v924
        %v926 = vsel %vm824, %v897, 0.0
        %v927 = vadd.f32 %v925, %v926
        %v928 = vsel %vm824, %v898, 0.0
        %v929 = vadd.f32 %v927, %v928
        %v930 = vrot.slane %v929, 4
        %v931 = vadd.f32 %v929, %v930
        %v932 = vrot.slane %v931, 2
        %v933 = vadd.f32 %v931, %v932
        %v934 = vrot.slane %v933, 1
        %v935 = vadd.f32 %v933, %v934
        %v936 = vadd.f32 %v882, %v935
        %937 = vst.msk [vmem:[#allocation5] sm:$0x1] %vm880, %v936
      $region68: #{tpu_custom_call.1} parent=55 // pred_fallthru
        _
      %p938 = scmp.eq.s32.totalorder %s26, 2
      // Predicated region
      $region69: #{tpu_custom_call.1} parent=55 // pred_check
        %p939 = pneg %p938
      $region70: #{tpu_custom_call.1} parent=55 // pred_check_branch
        %941 = sbr.rel (%p939) target = $region72
      $region71: #{tpu_custom_call.1} parent=55 // pred_region
        %s942 = smul.u32 %s27, 128
        %s943 = scalar_lea.vmem [#allocation6], %s942
        %v944 = vld [vmem:[%s943] sm:$0xff]
        %v945 = vld [vmem:[%s943 + $0x8] sm:$0xff]
        %v946 = vld [vmem:[%s943 + $0x10] sm:$0xff]
        %v947 = vld [vmem:[%s943 + $0x18] sm:$0xff]
        %v948 = vld [vmem:[%s943 + $0x20] sm:$0xff]
        %v949 = vld [vmem:[%s943 + $0x28] sm:$0xff]
        %v950 = vld [vmem:[%s943 + $0x30] sm:$0xff]
        %v951 = vld [vmem:[%s943 + $0x38] sm:$0xff]
        %v952 = vld [vmem:[%s943 + $0x40] sm:$0xff]
        %v953 = vld [vmem:[%s943 + $0x48] sm:$0xff]
        %v954 = vld [vmem:[%s943 + $0x50] sm:$0xff]
        %v955 = vld [vmem:[%s943 + $0x58] sm:$0xff]
        %v956 = vld [vmem:[%s943 + $0x60] sm:$0xff]
        %v957 = vld [vmem:[%s943 + $0x68] sm:$0xff]
        %v958 = vld [vmem:[%s943 + $0x70] sm:$0xff]
        %v959 = vld [vmem:[%s943 + $0x78] sm:$0xff]
        %v960 = vld [vmem:[#allocation4] sm:$0x1]
        %v961 = vmul.f32 %v960, 0.0078125
        %v962 = vld [vmem:[#allocation5] sm:$0x1]
        %v963 = vmul.f32 %v962, 0.0078125
        %v964 = vmul.f32 %v961, %v961
        %v965 = vsub.f32 %v963, %v964
        %v966 = vld [vmem:[%s7 + $0x1] sm:$0x1]
        %v967 = vld [vmem:[%s7 + $0x2] sm:$0x1]
        %v969 = vperm.slane %v961, 0
        %v971 = vsub.f32 %v944, %v969
        %v972 = vsub.f32 %v945, %v969
        %v973 = vsub.f32 %v946, %v969
        %v974 = vsub.f32 %v947, %v969
        %v975 = vsub.f32 %v948, %v969
        %v976 = vsub.f32 %v949, %v969
        %v977 = vsub.f32 %v950, %v969
        %v978 = vsub.f32 %v951, %v969
        %v979 = vsub.f32 %v952, %v969
        %v980 = vsub.f32 %v953, %v969
        %v981 = vsub.f32 %v954, %v969
        %v982 = vsub.f32 %v955, %v969
        %v983 = vsub.f32 %v956, %v969
        %v984 = vsub.f32 %v957, %v969
        %v985 = vsub.f32 %v958, %v969
        %v986 = vsub.f32 %v959, %v969
        %v987 = vadd.f32 %v965, 1e-05
        %v988 = vrsqrt.pop %v987
        %v989 = vmul.f32 %v988, %v987
        %v990 = vmul.f32 %v989, %v988
        %v991 = vmul.f32 0.5, %v990
        %v992 = vsub.f32 1.5, %v991
        %v993 = vmul.f32 %v988, %v992
        %vm994 = vweird.f32 %v987
        %vm995 = vweird.f32 %v988
        %vm996 = vmor %vm994, %vm995
        %v997 = vsel %vm996, %v988, %v993
        %v998 = vmul.f32 %v966, %v997
        %v999 = vperm.slane %v998, 0
        %v1000 = vmul.f32 %v971, %v999
        %v1001 = vmul.f32 %v972, %v999
        %v1002 = vmul.f32 %v973, %v999
        %v1003 = vmul.f32 %v974, %v999
        %v1004 = vmul.f32 %v975, %v999
        %v1005 = vmul.f32 %v976, %v999
        %v1006 = vmul.f32 %v977, %v999
        %v1007 = vmul.f32 %v978, %v999
        %v1008 = vmul.f32 %v979, %v999
        %v1009 = vmul.f32 %v980, %v999
        %v1010 = vmul.f32 %v981, %v999
        %v1011 = vmul.f32 %v982, %v999
        %v1012 = vmul.f32 %v983, %v999
        %v1013 = vmul.f32 %v984, %v999
        %v1014 = vmul.f32 %v985, %v999
        %v1015 = vmul.f32 %v986, %v999
        %v1016 = vperm.slane %v967, 0
        %v1017 = vadd.f32 %v1000, %v1016
        %v1018 = vadd.f32 %v1001, %v1016
        %v1019 = vadd.f32 %v1002, %v1016
        %v1020 = vadd.f32 %v1003, %v1016
        %v1021 = vadd.f32 %v1004, %v1016
        %v1022 = vadd.f32 %v1005, %v1016
        %v1023 = vadd.f32 %v1006, %v1016
        %v1024 = vadd.f32 %v1007, %v1016
        %v1025 = vadd.f32 %v1008, %v1016
        %v1026 = vadd.f32 %v1009, %v1016
        %v1027 = vadd.f32 %v1010, %v1016
        %v1028 = vadd.f32 %v1011, %v1016
        %v1029 = vadd.f32 %v1012, %v1016
        %v1030 = vadd.f32 %v1013, %v1016
        %v1031 = vadd.f32 %v1014, %v1016
        %v1032 = vadd.f32 %v1015, %v1016
        %v1033 = vmax.f32 %v1017, 0.0
        %v1034 = vmax.f32 %v1018, 0.0
        %v1035 = vmax.f32 %v1019, 0.0
        %v1036 = vmax.f32 %v1020, 0.0
        %v1037 = vmax.f32 %v1021, 0.0
        %v1038 = vmax.f32 %v1022, 0.0
        %v1039 = vmax.f32 %v1023, 0.0
        %v1040 = vmax.f32 %v1024, 0.0
        %v1041 = vmax.f32 %v1025, 0.0
        %v1042 = vmax.f32 %v1026, 0.0
        %v1043 = vmax.f32 %v1027, 0.0
        %v1044 = vmax.f32 %v1028, 0.0
        %v1045 = vmax.f32 %v1029, 0.0
        %v1046 = vmax.f32 %v1030, 0.0
        %v1047 = vmax.f32 %v1031, 0.0
        %v1048 = vmax.f32 %v1032, 0.0
        %v1049 = vld [vmem:[%s4] sm:$0x3]
        %1050 = vmatpush.msra.mxu0 %v1048
        %1051 = vmatpush.msra.mxu0 %v1047
        %1052 = vmatpush.msra.mxu0 %v1046
        %1053 = vmatpush.msra.mxu0 %v1045
        %1054 = vmatpush.msra.mxu0 %v1044
        %1055 = vmatpush.msra.mxu0 %v1043
        %1056 = vmatpush.msra.mxu0 %v1042
        %1057 = vmatpush.msra.mxu0 %v1041
        %1058 = vmatpush.msra.mxu0 %v1040
        %1059 = vmatpush.msra.mxu0 %v1039
        %1060 = vmatpush.msra.mxu0 %v1038
        %1061 = vmatpush.msra.mxu0 %v1037
        %1062 = vmatpush.msra.mxu0 %v1036
        %1063 = vmatpush.msra.mxu0 %v1035
        %1064 = vmatpush.msra.mxu0 %v1034
        %1065 = vmatpush.msra.mxu0 %v1033
        %1066 = vmatmul.f32.gmra.mxu0 %v1049
        %v1067 = vpop.f32.mrf.mxu0
        %v1068 = vadd.f32 0.0, %v1067
        %1069 = vdwg.mxu0
        %v1070 = vld [vmem:[%s7 + $0x3] sm:$0x1]
        %v1071 = vperm.slane %v1070, 0
        %v1072 = vmul.f32 %v1068, %v1071
        %vm1073 = vcmask 254976
        %v1074 = vsel %vm1073, %v1072, 0.0
        %1075 = vadd.xlane.f32.xlu0 %v1074
        %v1076 = vpop.xlane.xlu0 %1075
        %v1077 = vld [vmem:[#allocation7] sm:$0x1]
        %v1079 = vperm.slane %v1077, 0
        %v1081 = vadd.f32 %v1076, %v1079
        %vm1082 = vcmask 1024
        %1083 = vst.msk [vmem:[%s402] sm:$0x3] %vm1082, %v1081
      $region72: #{tpu_custom_call.1} parent=55 // pred_fallthru
        _
      %p1084 = scmp.eq.s32.totalorder %s26, 2
      %s1085 = scalar_select %p1084, %s27, 0
      %p1086 = scmp.lt.s32.totalorder %s1085, 0
      %s1087 = scalar_select %p1086, %s1085, 0
      %s1088 = smul.addr %s1087, 2
      %s1089 = scalar_lea.vmem %s9, %s1088
      // Predicated region
      $region73: #{tpu_custom_call.1} parent=55 // pred_check
        %p1090 = pneg %p263
      $region74: #{tpu_custom_call.1} parent=55 // pred_check_branch
        %1092 = sbr.rel (%p1090) target = $region76
      $region75: #{tpu_custom_call.1} parent=55 // pred_region
        %p1093 = scmp.eq.s32.totalorder %s26, 2
        %s1094 = scalar_select %p1093, %s27, 0
      $region76: #{tpu_custom_call.1} parent=55 // pred_fallthru
        _
    $region56: #{tpu_custom_call.1} parent=5 // pred_fallthru
      _
    %p1095 = scmp.le.s32.totalorder 2, %s17
    // Predicated region
    $region77: #{tpu_custom_call.1} parent=5 // pred_check
      %p1096 = pneg %p1095
    $region78: #{tpu_custom_call.1} parent=5 // pred_check_branch
      %1098 = sbr.rel (%p1096) target = $region80
    $region79: #{tpu_custom_call.1} parent=5 // pred_region
      %s1099 = ssub.s32 %s17, 2
      // Predicated region
      $region81: #{tpu_custom_call.1} parent=79 // pred_check
        %p1100 = pneg %p269
      $region82: #{tpu_custom_call.1} parent=79 // pred_check_branch
        %1102 = sbr.rel (%p1100) target = $region84
      $region83: #{tpu_custom_call.1} parent=79 // pred_region
        %p1103 = scmp.eq.s32.totalorder %s28, 2
        %s1104 = scalar_select %p1103, %s29, 0
        %p1105 = scmp.lt.s32.totalorder %s1104, 0
        %s1106 = scalar_select %p1105, %s1104, 0
        %s1107 = smul.addr %s1106, 2
        %s1108 = scalar_lea.vmem %s9, %s1107
      $region84: #{tpu_custom_call.1} parent=79 // pred_fallthru
        _
    $region80: #{tpu_custom_call.1} parent=5 // pred_fallthru
      _
  $region6: #{tpu_custom_call.1} parent=0 // loop_footer
    %s21 = sadd.s32 1, %s17
  $region7: #{tpu_custom_call.1} parent=0 // loop_footer_branch
    %16 = sbr.rel target = $region3
  $region8: #{tpu_custom_call.1} parent=0 // loop_exit
    _

</llo_original>
